<compile_context>
chip_gen: v7x
topology: tpu7x:2x2x1
jax: 0.10.0
libtpu: 0.0.40
codegen_flags: <defaults>
</compile_context>

<pallas_src>
import functools

import jax
import jax.numpy as jnp
from jax import lax
from jax.experimental import pallas as pl
from jax.experimental.pallas import tpu as pltpu

LANE = 128
SUBLANE = 8
IO_DTYPE = jnp.bfloat16    # HBM activation dtype (input and output blocks)
MXU_DTYPE = jnp.bfloat16   # dtype fed to the 1x1-conv matmul (accumulation stays f32)


def _round_up(x, m):
    return ((x + m - 1) // m) * m


def dconv_kernel(x_ref, wdw_ref, bias_ref, wpw_ref, o_ref, *, width):
    """One (batch tile, out-channel tile) per grid step.

    x_ref    : (BT, H+2, Wp, Cp)    bf16 input, halo + sublane + channel padded
    wdw_ref  : (16, Cp)             depthwise 3x3 taps (tap-major), BN scale folded in (f32)
    bias_ref : (1, Cp)              folded BN bias  (beta - mean*scale) (f32)
    wpw_ref  : (Cp, CT)             1x1 conv weight tile (bf16, zero-padded)
    o_ref    : (BT*H*W, CT)         flat lane-dense bf16 output tile
    """
    BT, Hh, Wp, Cp = x_ref.shape
    H = Hh - 2
    W = width

    # depthwise 3x3, stride 1 (VPU, f32): 3 aligned dy row loads, dx shifts as value slices
    acc = None
    for dy in range(3):
        r = x_ref[:, dy:dy + H, :, :].astype(jnp.float32)        # (BT, H, Wp, Cp)
        for dx in range(3):
            term = r[:, :, dx:dx + W, :] * wdw_ref[3 * dy + dx]   # tap has BN scale folded
            acc = term if acc is None else acc + term

    # folded inference-BN bias + ReLU (f32 on VPU)
    h = jnp.maximum(acc + bias_ref[...], 0.0)

    # 1x1 conv as one lane-dense MXU matmul (bf16 in, f32 accumulate)
    h2 = h.reshape(BT * H * W, Cp).astype(wpw_ref.dtype)
    out = jnp.dot(h2, wpw_ref[...], preferred_element_type=jnp.float32)
    o_ref[...] = out.astype(o_ref.dtype)


def dconv_forward(x_nchw, params, *, eps=1e-5):
    """Pallas DConv forward. x_nchw: (N, Cin, H, W), PyTorch layout."""
    w_dw = params["convdw_w"]      # (Cin, 1, 3, 3)  depthwise
    w_pw = params["conv1x1_w"]     # (Cout, Cin, 1, 1)
    Cin, Cout = w_dw.shape[0], w_pw.shape[0]
    N, Cx, H, W = x_nchw.shape
    assert Cx == Cin, "input channels must match convdw in_planes"

    # channel padding: lane width 128; when Cin >= 256 round K up to 256 so the
    # 256-deep MXU contraction on v6e/v7x is fully used.
    cp_in = _round_up(Cin, 256 if Cin >= 256 else LANE)
    cp_out = _round_up(Cout, LANE)
    CT = LANE                               # output-channel tile (second grid axis)

    # NCHW -> NHWC bf16, 3x3/pad-1 halo, sublane-aligned width, channel zero-pad
    Wp = _round_up(W + 2, SUBLANE)
    x = jnp.transpose(x_nchw, (0, 2, 3, 1)).astype(IO_DTYPE)
    x = jnp.pad(x, ((0, 0), (1, 1), (1, Wp - (W + 1)), (0, cp_in - Cin)))

    # fold inference-mode BN: scale goes into the depthwise taps, bias stays separate
    scale = (params["bn_gamma"] / jnp.sqrt(params["bn_var"] + eps)).astype(jnp.float32)
    bias = (params["bn_beta"] - params["bn_mean"] * scale).astype(jnp.float32)
    bias = jnp.pad(bias, (0, cp_in - Cin)).reshape(1, cp_in)

    # depthwise taps (Cin,1,3,3) -> tap-major slab (16, Cp), BN scale pre-multiplied
    taps = jnp.transpose(w_dw[:, 0], (1, 2, 0)).reshape(9, Cin).astype(jnp.float32)
    taps = taps * scale[None, :]
    wdw = jnp.pad(taps, ((0, 16 - 9), (0, cp_in - Cin)))

    # 1x1 conv weights (Cout,Cin,1,1) -> (Cp_in, Cp_out), bf16 for the MXU
    wpw = jnp.transpose(w_pw[:, :, 0, 0], (1, 0))               # (Cin, Cout)
    wpw = jnp.pad(wpw, ((0, cp_in - Cin), (0, cp_out - Cout))).astype(MXU_DTYPE)

    # batch tile from a VMEM budget that counts blocks AND in-kernel temporaries
    def vmem_estimate(bt):
        in_blk = bt * (H + 2) * Wp * cp_in * 2                  # bf16 input block
        out_blk = bt * H * W * CT * 2                           # bf16 output block
        wgt = 16 * cp_in * 4 + cp_in * 4 + cp_in * CT * 2
        tmp = (3 * bt * H * Wp * cp_in * 4                      # upcast dy rows (f32)
               + bt * H * W * cp_in * 4                         # acc / h (f32)
               + bt * H * W * cp_in * 2                         # h2 (bf16)
               + bt * H * W * CT * 4)                           # matmul result (f32)
        return 2 * (in_blk + out_blk + wgt) + tmp               # double-buffered I/O

    budget = 40 << 20         # conservative: fits v7x's 64 MiB/TC with headroom
    BT = 1
    for bt in range(min(N, 8), 0, -1):
        if vmem_estimate(bt) <= budget and (N < 2 or pl.cdiv(N, bt) >= 2):
            BT = bt
            break
    n_pad = pl.cdiv(N, BT) * BT
    if n_pad != N:
        x = jnp.pad(x, ((0, n_pad - N), (0, 0), (0, 0), (0, 0)))

    vmem_limit = int(min(max(vmem_estimate(BT) + (4 << 20), 16 << 20), 48 << 20))
    grid = (n_pad // BT, cp_out // CT)

    out2d = pl.pallas_call(
        functools.partial(dconv_kernel, width=W),
        out_shape=jax.ShapeDtypeStruct((n_pad * H * W, cp_out), IO_DTYPE),
        grid_spec=pltpu.PrefetchScalarGridSpec(
            num_scalar_prefetch=0,
            grid=grid,
            in_specs=[
                pl.BlockSpec((BT, H + 2, Wp, cp_in), lambda n, j: (n, 0, 0, 0)),
                pl.BlockSpec((16, cp_in), lambda n, j: (0, 0)),
                pl.BlockSpec((1, cp_in), lambda n, j: (0, 0)),
                pl.BlockSpec((cp_in, CT), lambda n, j: (0, j)),
            ],
            out_specs=pl.BlockSpec((BT * H * W, CT), lambda n, j: (n, j)),
        ),
        compiler_params=pltpu.CompilerParams(
            dimension_semantics=("parallel", "parallel"),
            vmem_limit_bytes=vmem_limit),
    )(x, wdw, bias, wpw)

    # flat (rows, Cp_out) -> (N, Cout, H, W) in f32
    out = out2d.reshape(n_pad, H, W, cp_out)[:N, :, :, :Cout].astype(jnp.float32)
    return jnp.transpose(out, (0, 3, 1, 2))


def dconv_reference(x, p, *, eps=1e-5):
    """Pure-JAX mirror of the PyTorch DConv forward (NCHW), for verification."""
    Cin = p["convdw_w"].shape[0]
    conv = functools.partial(
        lax.conv_general_dilated,
        window_strides=(1, 1),
        dimension_numbers=("NCHW", "OIHW", "NCHW"))
    dw = conv(x, p["convdw_w"], padding=((1, 1), (1, 1)), feature_group_count=Cin)
    inv = 1.0 / jnp.sqrt(p["bn_var"] + eps)
    h = (dw - p["bn_mean"][None, :, None, None]) * inv[None, :, None, None] \
        * p["bn_gamma"][None, :, None, None] + p["bn_beta"][None, :, None, None]
    h = jax.nn.relu(h)
    return conv(h, p["conv1x1_w"], padding=((0, 0), (0, 0)))


def init_params(key, in_planes, out_planes):
    ks = jax.random.split(key, 6)
    return {
        "convdw_w": 0.1 * jax.random.normal(ks[0], (in_planes, 1, 3, 3), jnp.float32),
        "conv1x1_w": 0.1 * jax.random.normal(ks[1], (out_planes, in_planes, 1, 1), jnp.float32),
        "bn_gamma": 1.0 + 0.1 * jax.random.normal(ks[2], (in_planes,), jnp.float32),
        "bn_beta": 0.1 * jax.random.normal(ks[3], (in_planes,), jnp.float32),
        "bn_mean": 0.1 * jax.random.normal(ks[4], (in_planes,), jnp.float32),
        "bn_var": jax.random.uniform(ks[5], (in_planes,), jnp.float32, 0.5, 1.5),
    }


if __name__ == "__main__":
    N, Cin, Cout, H, W = 2, 4, 4, 16, 16
    key = jax.random.PRNGKey(0)
    kx, kp = jax.random.split(key)
    x = jax.random.normal(kx, (N, Cin, H, W), jnp.float32)
    params = init_params(kp, Cin, Cout)

    out = dconv_forward(x, params)
    out = jax.block_until_ready(out)

    ref = dconv_reference(x, params)
    assert out.shape == ref.shape == (N, Cout, H, W)
    # tolerance accounts for bf16 HBM activations and the bf16-in/f32-acc MXU matmul
    tol = 2e-2
    assert jnp.allclose(out, ref, rtol=tol, atol=tol), \
        f"max abs err {jnp.max(jnp.abs(out - ref))}"

    print("KERNEL_OK")
</pallas_src>

<mosaic_0001>
module attributes {stable_mosaic.version = 11 : i64} {
  func.func @dconv_kernel(%arg0: i32, %arg1: i32, %arg2: memref<1x18x24x128xbf16, #tpu.memory_space<vmem>>, %arg3: memref<16x128xf32, #tpu.memory_space<vmem>>, %arg4: memref<1x128xf32, #tpu.memory_space<vmem>>, %arg5: memref<128x128xbf16, #tpu.memory_space<vmem>>, %arg6: memref<256x128xbf16, #tpu.memory_space<vmem>>) attributes {dimension_semantics = [#tpu.dimension_semantics<parallel>, #tpu.dimension_semantics<parallel>], iteration_bounds = array<i64: 2, 1>, scalar_prefetch = 0 : i64, scratch_operands = 0 : i64, tpu.core_type = #tpu.core_type<tc>, window_params = [{transform_indices = @transform_0, window_bounds = array<i64: 1, 18, 24, 128>}, {pipeline_mode = #tpu.pipeline_mode<synchronous>, transform_indices = @transform_1, window_bounds = array<i64: 16, 128>}, {pipeline_mode = #tpu.pipeline_mode<synchronous>, transform_indices = @transform_2, window_bounds = array<i64: 1, 128>}, {transform_indices = @transform_3, window_bounds = array<i64: 128, 128>}, {transform_indices = @transform_4, window_bounds = array<i64: 256, 128>}]} {
    %c0 = arith.constant 0 : index
    %c0_0 = arith.constant 0 : index
    %c0_1 = arith.constant 0 : index
    %c0_2 = arith.constant 0 : index
    %0 = vector.load %arg2[%c0, %c0_0, %c0_1, %c0_2] : memref<1x18x24x128xbf16, #tpu.memory_space<vmem>>, vector<1x16x24x128xbf16>
    %1 = arith.extf %0 : vector<1x16x24x128xbf16> to vector<1x16x24x128xf32>
    %2 = vector.extract_strided_slice %1 {offsets = [0, 0, 0, 0], sizes = [1, 16, 16, 128], strides = [1, 1, 1, 1]} : vector<1x16x24x128xf32> to vector<1x16x16x128xf32>
    %c0_3 = arith.constant 0 : index
    %c0_4 = arith.constant 0 : index
    %3 = vector.load %arg3[%c0_3, %c0_4] : memref<16x128xf32, #tpu.memory_space<vmem>>, vector<1x128xf32>
    %4 = vector.shape_cast %3 : vector<1x128xf32> to vector<128xf32>
    %5 = vector.shape_cast %4 : vector<128xf32> to vector<1x1x1x128xf32>
    %6 = vector.broadcast %5 : vector<1x1x1x128xf32> to vector<1x16x16x128xf32>
    %7 = arith.mulf %2, %6 : vector<1x16x16x128xf32>
    %8 = vector.extract_strided_slice %1 {offsets = [0, 0, 1, 0], sizes = [1, 16, 16, 128], strides = [1, 1, 1, 1]} : vector<1x16x24x128xf32> to vector<1x16x16x128xf32>
    %c1 = arith.constant 1 : index
    %c0_5 = arith.constant 0 : index
    %9 = vector.load %arg3[%c1, %c0_5] : memref<16x128xf32, #tpu.memory_space<vmem>>, vector<1x128xf32>
    %10 = vector.shape_cast %9 : vector<1x128xf32> to vector<128xf32>
    %11 = vector.shape_cast %10 : vector<128xf32> to vector<1x1x1x128xf32>
    %12 = vector.broadcast %11 : vector<1x1x1x128xf32> to vector<1x16x16x128xf32>
    %13 = arith.mulf %8, %12 : vector<1x16x16x128xf32>
    %14 = arith.addf %7, %13 : vector<1x16x16x128xf32>
    %15 = vector.extract_strided_slice %1 {offsets = [0, 0, 2, 0], sizes = [1, 16, 16, 128], strides = [1, 1, 1, 1]} : vector<1x16x24x128xf32> to vector<1x16x16x128xf32>
    %c2 = arith.constant 2 : index
    %c0_6 = arith.constant 0 : index
    %16 = vector.load %arg3[%c2, %c0_6] : memref<16x128xf32, #tpu.memory_space<vmem>>, vector<1x128xf32>
    %17 = vector.shape_cast %16 : vector<1x128xf32> to vector<128xf32>
    %18 = vector.shape_cast %17 : vector<128xf32> to vector<1x1x1x128xf32>
    %19 = vector.broadcast %18 : vector<1x1x1x128xf32> to vector<1x16x16x128xf32>
    %20 = arith.mulf %15, %19 : vector<1x16x16x128xf32>
    %21 = arith.addf %14, %20 : vector<1x16x16x128xf32>
    %c0_7 = arith.constant 0 : index
    %c1_8 = arith.constant 1 : index
    %c0_9 = arith.constant 0 : index
    %c0_10 = arith.constant 0 : index
    %22 = vector.load %arg2[%c0_7, %c1_8, %c0_9, %c0_10] : memref<1x18x24x128xbf16, #tpu.memory_space<vmem>>, vector<1x16x24x128xbf16>
    %23 = arith.extf %22 : vector<1x16x24x128xbf16> to vector<1x16x24x128xf32>
    %24 = vector.extract_strided_slice %23 {offsets = [0, 0, 0, 0], sizes = [1, 16, 16, 128], strides = [1, 1, 1, 1]} : vector<1x16x24x128xf32> to vector<1x16x16x128xf32>
    %c3 = arith.constant 3 : index
    %c0_11 = arith.constant 0 : index
    %25 = vector.load %arg3[%c3, %c0_11] : memref<16x128xf32, #tpu.memory_space<vmem>>, vector<1x128xf32>
    %26 = vector.shape_cast %25 : vector<1x128xf32> to vector<128xf32>
    %27 = vector.shape_cast %26 : vector<128xf32> to vector<1x1x1x128xf32>
    %28 = vector.broadcast %27 : vector<1x1x1x128xf32> to vector<1x16x16x128xf32>
    %29 = arith.mulf %24, %28 : vector<1x16x16x128xf32>
    %30 = arith.addf %21, %29 : vector<1x16x16x128xf32>
    %31 = vector.extract_strided_slice %23 {offsets = [0, 0, 1, 0], sizes = [1, 16, 16, 128], strides = [1, 1, 1, 1]} : vector<1x16x24x128xf32> to vector<1x16x16x128xf32>
    %c4 = arith.constant 4 : index
    %c0_12 = arith.constant 0 : index
    %32 = vector.load %arg3[%c4, %c0_12] : memref<16x128xf32, #tpu.memory_space<vmem>>, vector<1x128xf32>
    %33 = vector.shape_cast %32 : vector<1x128xf32> to vector<128xf32>
    %34 = vector.shape_cast %33 : vector<128xf32> to vector<1x1x1x128xf32>
    %35 = vector.broadcast %34 : vector<1x1x1x128xf32> to vector<1x16x16x128xf32>
    %36 = arith.mulf %31, %35 : vector<1x16x16x128xf32>
    %37 = arith.addf %30, %36 : vector<1x16x16x128xf32>
    %38 = vector.extract_strided_slice %23 {offsets = [0, 0, 2, 0], sizes = [1, 16, 16, 128], strides = [1, 1, 1, 1]} : vector<1x16x24x128xf32> to vector<1x16x16x128xf32>
    %c5 = arith.constant 5 : index
    %c0_13 = arith.constant 0 : index
    %39 = vector.load %arg3[%c5, %c0_13] : memref<16x128xf32, #tpu.memory_space<vmem>>, vector<1x128xf32>
    %40 = vector.shape_cast %39 : vector<1x128xf32> to vector<128xf32>
    %41 = vector.shape_cast %40 : vector<128xf32> to vector<1x1x1x128xf32>
    %42 = vector.broadcast %41 : vector<1x1x1x128xf32> to vector<1x16x16x128xf32>
    %43 = arith.mulf %38, %42 : vector<1x16x16x128xf32>
    %44 = arith.addf %37, %43 : vector<1x16x16x128xf32>
    %c0_14 = arith.constant 0 : index
    %c2_15 = arith.constant 2 : index
    %c0_16 = arith.constant 0 : index
    %c0_17 = arith.constant 0 : index
    %45 = vector.load %arg2[%c0_14, %c2_15, %c0_16, %c0_17] : memref<1x18x24x128xbf16, #tpu.memory_space<vmem>>, vector<1x16x24x128xbf16>
    %46 = arith.extf %45 : vector<1x16x24x128xbf16> to vector<1x16x24x128xf32>
    %47 = vector.extract_strided_slice %46 {offsets = [0, 0, 0, 0], sizes = [1, 16, 16, 128], strides = [1, 1, 1, 1]} : vector<1x16x24x128xf32> to vector<1x16x16x128xf32>
    %c6 = arith.constant 6 : index
    %c0_18 = arith.constant 0 : index
    %48 = vector.load %arg3[%c6, %c0_18] : memref<16x128xf32, #tpu.memory_space<vmem>>, vector<1x128xf32>
    %49 = vector.shape_cast %48 : vector<1x128xf32> to vector<128xf32>
    %50 = vector.shape_cast %49 : vector<128xf32> to vector<1x1x1x128xf32>
    %51 = vector.broadcast %50 : vector<1x1x1x128xf32> to vector<1x16x16x128xf32>
    %52 = arith.mulf %47, %51 : vector<1x16x16x128xf32>
    %53 = arith.addf %44, %52 : vector<1x16x16x128xf32>
    %54 = vector.extract_strided_slice %46 {offsets = [0, 0, 1, 0], sizes = [1, 16, 16, 128], strides = [1, 1, 1, 1]} : vector<1x16x24x128xf32> to vector<1x16x16x128xf32>
    %c7 = arith.constant 7 : index
    %c0_19 = arith.constant 0 : index
    %55 = vector.load %arg3[%c7, %c0_19] : memref<16x128xf32, #tpu.memory_space<vmem>>, vector<1x128xf32>
    %56 = vector.shape_cast %55 : vector<1x128xf32> to vector<128xf32>
    %57 = vector.shape_cast %56 : vector<128xf32> to vector<1x1x1x128xf32>
    %58 = vector.broadcast %57 : vector<1x1x1x128xf32> to vector<1x16x16x128xf32>
    %59 = arith.mulf %54, %58 : vector<1x16x16x128xf32>
    %60 = arith.addf %53, %59 : vector<1x16x16x128xf32>
    %61 = vector.extract_strided_slice %46 {offsets = [0, 0, 2, 0], sizes = [1, 16, 16, 128], strides = [1, 1, 1, 1]} : vector<1x16x24x128xf32> to vector<1x16x16x128xf32>
    %c8 = arith.constant 8 : index
    %c0_20 = arith.constant 0 : index
    %62 = vector.load %arg3[%c8, %c0_20] : memref<16x128xf32, #tpu.memory_space<vmem>>, vector<1x128xf32>
    %63 = vector.shape_cast %62 : vector<1x128xf32> to vector<128xf32>
    %64 = vector.shape_cast %63 : vector<128xf32> to vector<1x1x1x128xf32>
    %65 = vector.broadcast %64 : vector<1x1x1x128xf32> to vector<1x16x16x128xf32>
    %66 = arith.mulf %61, %65 : vector<1x16x16x128xf32>
    %67 = arith.addf %60, %66 : vector<1x16x16x128xf32>
    %c0_21 = arith.constant 0 : index
    %c0_22 = arith.constant 0 : index
    %68 = vector.load %arg4[%c0_21, %c0_22] : memref<1x128xf32, #tpu.memory_space<vmem>>, vector<1x128xf32>
    %69 = vector.shape_cast %68 : vector<1x128xf32> to vector<1x1x1x128xf32>
    %70 = vector.broadcast %69 : vector<1x1x1x128xf32> to vector<1x16x16x128xf32>
    %71 = arith.addf %67, %70 : vector<1x16x16x128xf32>
    %cst = arith.constant 0.000000e+00 : f32
    %72 = vector.broadcast %cst : f32 to vector<1x16x16x128xf32>
    %73 = arith.maximumf %71, %72 : vector<1x16x16x128xf32>
    %74 = vector.shape_cast %73 : vector<1x16x16x128xf32> to vector<256x128xf32>
    %75 = arith.truncf %74 : vector<256x128xf32> to vector<256x128xbf16>
    %c0_23 = arith.constant 0 : index
    %c0_24 = arith.constant 0 : index
    %76 = vector.load %arg5[%c0_23, %c0_24] : memref<128x128xbf16, #tpu.memory_space<vmem>>, vector<128x128xbf16>
    %cst_25 = arith.constant dense<0.000000e+00> : vector<256x128xf32>
    %77 = tpu.matmul %75, %76, %cst_25 {dimension_numbers = #tpu.dot_dimension_numbers<[1], [0], [0], [1], [0, 0, 1, 1], [], []>} : vector<256x128xbf16>, vector<128x128xbf16>, vector<256x128xf32> -> vector<256x128xf32>
    %78 = arith.truncf %77 : vector<256x128xf32> to vector<256x128xbf16>
    %c0_26 = arith.constant 0 : index
    %c0_27 = arith.constant 0 : index
    %79 = vector.load %arg6[%c0_26, %c0_27] : memref<256x128xbf16, #tpu.memory_space<vmem>>, vector<256x128xbf16>
    tpu.vector_store %arg6[%c0_26, %c0_27], %78 {strides = array<i32>} : memref<256x128xbf16, #tpu.memory_space<vmem>>, vector<256x128xbf16>,
    return
  }
  func.func @transform_0(%arg0: i32, %arg1: i32) -> (i32, i32, i32, i32) {
    %c0_i32 = arith.constant 0 : i32
    %c0_i32_0 = arith.constant 0 : i32
    %c0_i32_1 = arith.constant 0 : i32
    %c0_i32_2 = arith.constant 0 : i32
    return %arg0, %c0_i32, %c0_i32_0, %c0_i32_1 : i32, i32, i32, i32
  }
  func.func @transform_1(%arg0: i32, %arg1: i32) -> (i32, i32) {
    %c0_i32 = arith.constant 0 : i32
    %c0_i32_0 = arith.constant 0 : i32
    %c0_i32_1 = arith.constant 0 : i32
    return %c0_i32, %c0_i32_0 : i32, i32
  }
  func.func @transform_2(%arg0: i32, %arg1: i32) -> (i32, i32) {
    %c0_i32 = arith.constant 0 : i32
    %c0_i32_0 = arith.constant 0 : i32
    %c0_i32_1 = arith.constant 0 : i32
    return %c0_i32, %c0_i32_0 : i32, i32
  }
  func.func @transform_3(%arg0: i32, %arg1: i32) -> (i32, i32) {
    %c0_i32 = arith.constant 0 : i32
    %c0_i32_0 = arith.constant 0 : i32
    return %c0_i32, %arg1 : i32, i32
  }
  func.func @transform_4(%arg0: i32, %arg1: i32) -> (i32, i32) {
    %c0_i32 = arith.constant 0 : i32
    return %arg0, %arg1 : i32, i32
  }
}

</mosaic_0001>

<llo_original>
// kernel: tpu_custom_call.1
$region0: #{tpu_custom_call.1}
  #allocation0 [shape = 'u32[]', space=smem, size = 0x4, offset = 0x4, fixed_abs, tag = 'smem constant byte address 0x4 - core index']
  #allocation1 [shape = 'u32[144,128]{1,0:T(1,128)}', space=vmem, size = 0x12000, scoped, tag = 'internal scratch']
  %s0 = inlined_call_operand.hbm [shape: bf16[2,18,24,128], index: 0, kind: input, shape index: {}]
  %s1 = inlined_call_operand.hbm [shape: f32[16,128], index: 1, kind: input, shape index: {}]
  %s2 = inlined_call_operand.vmem [shape: f32[1,128], index: 2, kind: input, shape index: {}]
  %s3 = inlined_call_operand.hbm [shape: bf16[128,128], index: 3, kind: input, shape index: {}]
  %s4 = inlined_call_operand.hbm [shape: bf16[512,128], index: 4, kind: output, shape index: {}]
  %s5 = sld [smem:[#allocation0]]
  $region61: #{tpu_custom_call.1} parent=0
    _
  %s7 = ssub.s32 1, %s5
  %s8 = scalar_select 0, %s7, %s5
  $region1: #{tpu_custom_call.1} parent=0
    #allocation2 [shape = 'u8[221184]{0}', space=vmem, size = 0x36000, scoped, tag = 'input window, operand 0']
    #allocation3 [shape = 's32[2]{0}', space=sflag, size = 0x8, scoped, tag = 'scoped memory for tpu_custom_call.1']
    #allocation4 [shape = 's32[2]{0}', space=sflag, size = 0x8, scoped, tag = 'scoped memory for tpu_custom_call.1']
    #allocation5 [shape = 'u8[8192]{0}', space=vmem, size = 0x2000, scoped, tag = 'input window, operand 1, single buffered']
    #allocation6 [shape = 's32[1]{0}', space=sflag, size = 0x4, scoped, tag = 'scoped memory for tpu_custom_call.1']
    #allocation7 [shape = 'u8[32768]{0}', space=vmem, size = 0x8000, scoped, tag = 'input window, operand 3, single buffered']
    #allocation8 [shape = 'u8[131072]{0}', space=vmem, size = 0x20000, scoped, tag = 'output window, operand 0']
    %9 = vsyncpa [#allocation3], 0
    %s10 = scalar_lea.sflag [#allocation3], 1
    %11 = vsyncpa %s10, 0
    %12 = vsyncpa [#allocation6], 0
    %13 = vsyncpa [#allocation4], 0
    %s14 = scalar_lea.sflag [#allocation4], 1
    %15 = vsyncpa %s14, 0
    loop: start=0, step=1, limit=4
    $region2: #{tpu_custom_call.1} parent=1 // loop_pre_header
      _
    $region3: #{tpu_custom_call.1} parent=1 // loop_header
      %s17 = sphi 0, %s21
      %p18 = scmp.ge.s32.totalorder %s17, 4
      %s24 = sphi 0, %s36
      %s25 = sphi 0, %s32
      %s26 = sphi 0, %s24
      %s27 = sphi 0, %s25
      %s28 = sphi 0, %s26
      %s29 = sphi 0, %s27
      %s39 = sphi 0, %s41
      %s42 = sphi 0, %s39
      %s43 = sphi 0, %s42
      %s59 = sphi 0, %s43
      %s63 = sphi 0, %s63
      %s65 = sphi 0, %s63
      %s66 = sphi 0, %s65
      %s80 = sphi 0, %s66
      %s84 = sphi 0, %s84
      %s86 = sphi 0, %s84
      %s87 = sphi 0, %s86
      %s101 = sphi 0, %s87
      %s107 = sphi 0, %s109
      %s110 = sphi 0, %s107
      %s111 = sphi 0, %s110
      %s127 = sphi 0, %s111
      %s135 = sphi 0, %s137
      %s138 = sphi 0, %s135
      %s139 = sphi 0, %s138
      %s155 = sphi 0, %s139
    $region4: #{tpu_custom_call.1} parent=1 // loop_header_branch
      %20 = sbr.rel (%p18) target = $region8
    $region5: #{tpu_custom_call.1} parent=1 // loop_body
      %s22 = ssub.s32 %s17, 1
      %s23 = ssub.s32 %s17, 2
      %s30 = sadd.s32 1, %s25
      %p31 = scmp.ge.s32.totalorder %s30, 1
      %s32 = scalar_select %p31, 0, %s30
      %s33 = sadd.s32 1, %s24
      %s34 = scalar_select %p31, %s33, %s24
      %p35 = scmp.ge.s32.totalorder %s34, 2
      %s36 = scalar_select %p35, 0, %s34
      %s37 = ssub.s32 %s24, %s36
      %p38 = scmp.eq.s32.totalorder %s37, 0
      %s40 = sadd.s32 %s39, 1
      %s41 = scalar_select %p38, %s39, %s40
      %p44 = pneg %p38
      %p45 = scmp.eq.s32.totalorder %s17, 1
      %p46 = por %p44, %p45
      %p47 = scmp.ne.s32.totalorder %s39, %s42
      %p48 = scmp.eq.s32.totalorder %s17, 0
      %p49 = por %p47, %p48
      %p50 = scmp.ne.s32.totalorder %s39, %s42
      %p51 = scmp.eq.s32.totalorder %s22, 1
      %p52 = por %p50, %p51
      %p53 = scmp.ne.s32.totalorder %s42, %s43
      %p54 = scmp.eq.s32.totalorder %s22, 0
      %p55 = por %p53, %p54
      %p56 = scmp.ne.s32.totalorder %s42, %s43
      %p57 = scmp.eq.s32.totalorder %s23, 1
      %p58 = por %p56, %p57
      %p60 = scmp.ne.s32.totalorder %s43, %s59
      %p61 = scmp.eq.s32.totalorder %s23, 0
      %p62 = por %p60, %p61
      %s64 = sadd.s32 %s63, 1
      %p67 = scmp.eq.s32.totalorder %s17, 1
      %p68 = scmp.ne.s32.totalorder %s63, %s65
      %p69 = scmp.eq.s32.totalorder %s17, 0
      %p70 = por %p68, %p69
      %p71 = scmp.ne.s32.totalorder %s63, %s65
      %p72 = scmp.eq.s32.totalorder %s22, 1
      %p73 = por %p71, %p72
      %p74 = scmp.ne.s32.totalorder %s65, %s66
      %p75 = scmp.eq.s32.totalorder %s22, 0
      %p76 = por %p74, %p75
      %p77 = scmp.ne.s32.totalorder %s65, %s66
      %p78 = scmp.eq.s32.totalorder %s23, 1
      %p79 = por %p77, %p78
      %p81 = scmp.ne.s32.totalorder %s66, %s80
      %p82 = scmp.eq.s32.totalorder %s23, 0
      %p83 = por %p81, %p82
      %s85 = sadd.s32 %s84, 1
      %p88 = scmp.eq.s32.totalorder %s17, 1
      %p89 = scmp.ne.s32.totalorder %s84, %s86
      %p90 = scmp.eq.s32.totalorder %s17, 0
      %p91 = por %p89, %p90
      %p92 = scmp.ne.s32.totalorder %s84, %s86
      %p93 = scmp.eq.s32.totalorder %s22, 1
      %p94 = por %p92, %p93
      %p95 = scmp.ne.s32.totalorder %s86, %s87
      %p96 = scmp.eq.s32.totalorder %s22, 0
      %p97 = por %p95, %p96
      %p98 = scmp.ne.s32.totalorder %s86, %s87
      %p99 = scmp.eq.s32.totalorder %s23, 1
      %p100 = por %p98, %p99
      %p102 = scmp.ne.s32.totalorder %s87, %s101
      %p103 = scmp.eq.s32.totalorder %s23, 0
      %p104 = por %p102, %p103
      %s105 = ssub.s32 %s25, %s32
      %p106 = scmp.eq.s32.totalorder %s105, 0
      %s108 = sadd.s32 %s107, 1
      %s109 = scalar_select %p106, %s107, %s108
      %p112 = pneg %p106
      %p113 = scmp.eq.s32.totalorder %s17, 1
      %p114 = por %p112, %p113
      %p115 = scmp.ne.s32.totalorder %s107, %s110
      %p116 = scmp.eq.s32.totalorder %s17, 0
      %p117 = por %p115, %p116
      %p118 = scmp.ne.s32.totalorder %s107, %s110
      %p119 = scmp.eq.s32.totalorder %s22, 1
      %p120 = por %p118, %p119
      %p121 = scmp.ne.s32.totalorder %s110, %s111
      %p122 = scmp.eq.s32.totalorder %s22, 0
      %p123 = por %p121, %p122
      %p124 = scmp.ne.s32.totalorder %s110, %s111
      %p125 = scmp.eq.s32.totalorder %s23, 1
      %p126 = por %p124, %p125
      %p128 = scmp.ne.s32.totalorder %s111, %s127
      %p129 = scmp.eq.s32.totalorder %s23, 0
      %p130 = por %p128, %p129
      %s131 = ssub.s32 %s24, %s36
      %s132 = ssub.s32 %s25, %s32
      %s133 = sor.u32 %s131, %s132
      %p134 = scmp.eq.s32.totalorder %s133, 0
      %s136 = sadd.s32 %s135, 1
      %s137 = scalar_select %p134, %s135, %s136
      %p140 = pneg %p134
      %p141 = scmp.eq.s32.totalorder %s17, 1
      %p142 = por %p140, %p141
      %p143 = scmp.ne.s32.totalorder %s135, %s138
      %p144 = scmp.eq.s32.totalorder %s17, 0
      %p145 = por %p143, %p144
      %p146 = scmp.ne.s32.totalorder %s135, %s138
      %p147 = scmp.eq.s32.totalorder %s22, 1
      %p148 = por %p146, %p147
      %p149 = scmp.ne.s32.totalorder %s138, %s139
      %p150 = scmp.eq.s32.totalorder %s22, 0
      %p151 = por %p149, %p150
      %p152 = scmp.ne.s32.totalorder %s138, %s139
      %p153 = scmp.eq.s32.totalorder %s23, 1
      %p154 = por %p152, %p153
      %p156 = scmp.ne.s32.totalorder %s139, %s155
      %p157 = scmp.eq.s32.totalorder %s23, 0
      %p158 = por %p156, %p157
      %p159 = scmp.le.s32.totalorder 1, %s17
      %p160 = scmp.lt.s32.totalorder %s17, 3
      %p161 = pnand %p159, %p160
      %p162 = pneg %p161
      // Predicated region
      $region9: #{tpu_custom_call.1} parent=5 // pred_check
        _
      $region10: #{tpu_custom_call.1} parent=5 // pred_check_branch
        %164 = sbr.rel (%p161) target = $region12
      $region11: #{tpu_custom_call.1} parent=5 // pred_region
        %s165 = ssub.s32 %s17, 1
        // Predicated region
        $region13: #{tpu_custom_call.1} parent=11 // pred_check
          %p166 = pneg %p76
        $region14: #{tpu_custom_call.1} parent=11 // pred_check_branch
          %168 = sbr.rel (%p166) target = $region16
        $region15: #{tpu_custom_call.1} parent=11 // pred_region
          %s170 = ssub.s32 256, 256
          %171 = vsyncadd [#allocation6], %s170
          %s172 = sshll.u32 [#allocation5], 4
          %s173 = int_to_ptr.vmem [resolvable:$true] %s172
          %178 = dma.hbm_to_vmem [thread:$0]  %s1, 256, %s173, [#allocation6], 128, 128, 8
        $region16: #{tpu_custom_call.1} parent=11 // pred_fallthru
          _
        // Predicated region
        $region17: #{tpu_custom_call.1} parent=11 // pred_check
          %p179 = pneg %p97
        $region18: #{tpu_custom_call.1} parent=11 // pred_check_branch
          %181 = sbr.rel (%p179) target = $region20
        $region19: #{tpu_custom_call.1} parent=11 // pred_region
          _
        $region20: #{tpu_custom_call.1} parent=11 // pred_fallthru
          _
        // Predicated region
        $region21: #{tpu_custom_call.1} parent=11 // pred_check
          %p182 = pneg %p123
        $region22: #{tpu_custom_call.1} parent=11 // pred_check_branch
          %184 = sbr.rel (%p182) target = $region24
        $region23: #{tpu_custom_call.1} parent=11 // pred_region
          %s186 = ssub.s32 1024, 1024
          %187 = vsyncadd [#allocation6], %s186
          %s188 = smul.addr %s27, 64
          %s189 = scalar_lea.hbm %s3, %s188
          %s190 = sshll.u32 [#allocation7], 4
          %s191 = int_to_ptr.vmem [resolvable:$true] %s190
          %196 = dma.hbm_to_vmem [thread:$0]  %s189, 1024, %s191, [#allocation6], 64, 64, 4
        $region24: #{tpu_custom_call.1} parent=11 // pred_fallthru
          _
      $region12: #{tpu_custom_call.1} parent=5 // pred_fallthru
        _
      %p197 = scmp.lt.s32.totalorder %s17, 2
      // Predicated region
      $region25: #{tpu_custom_call.1} parent=5 // pred_check
        %p198 = pneg %p197
      $region26: #{tpu_custom_call.1} parent=5 // pred_check_branch
        %200 = sbr.rel (%p198) target = $region28
      $region27: #{tpu_custom_call.1} parent=5 // pred_region
        // Predicated region
        $region29: #{tpu_custom_call.1} parent=27 // pred_check
          %p201 = pneg %p49
        $region30: #{tpu_custom_call.1} parent=27 // pred_check_branch
          %203 = sbr.rel (%p201) target = $region32
        $region31: #{tpu_custom_call.1} parent=27 // pred_region
          %s204 = sand.u32 %s39, 1
          %s205 = scalar_lea.sflag [#allocation3], %s204
          %s206 = sand.u32 %s39, 1
          %s207 = smul.addr %s206, 216
          %s208 = scalar_lea.vmem [#allocation2], %s207
          %s210 = ssub.s32 3456, 3456
          %211 = vsyncadd %s205, %s210
          %s212 = smul.addr %s24, 54
          %s213 = smul.addr %s212, 64
          %s214 = scalar_lea.hbm %s0, %s213
          %s215 = sshll.u32 %s208, 4
          %s216 = int_to_ptr.vmem [resolvable:$true] %s215
          %221 = dma.hbm_to_vmem [thread:$0]  %s214, 3456, %s216, %s205, 64, 64, 4
        $region32: #{tpu_custom_call.1} parent=27 // pred_fallthru
          _
      $region28: #{tpu_custom_call.1} parent=5 // pred_fallthru
        _
      %p222 = scmp.le.s32.totalorder 1, %s17
      %p223 = scmp.lt.s32.totalorder %s17, 3
      %p224 = pnand %p222, %p223
      %p225 = pneg %p224
      // Predicated region
      $region33: #{tpu_custom_call.1} parent=5 // pred_check
        _
      $region34: #{tpu_custom_call.1} parent=5 // pred_check_branch
        %227 = sbr.rel (%p224) target = $region36
      $region35: #{tpu_custom_call.1} parent=5 // pred_region
        %s228 = ssub.s32 %s17, 1
        %s229 = sand.u32 %s42, 1
        %s230 = scalar_lea.sflag [#allocation3], %s229
        %s231 = sand.u32 %s42, 1
        %s232 = smul.addr %s231, 216
        %s233 = scalar_lea.vmem [#allocation2], %s232
        // Predicated region
        $region37: #{tpu_custom_call.1} parent=35 // pred_check
          %p234 = pneg %p55
        $region38: #{tpu_custom_call.1} parent=35 // pred_check_branch
          %236 = sbr.rel (%p234) target = $region40
        $region39: #{tpu_custom_call.1} parent=35 // pred_region
          %237 = dma.done %s230, 3456
        $region40: #{tpu_custom_call.1} parent=35 // pred_fallthru
          _
        // Predicated region
        $region41: #{tpu_custom_call.1} parent=35 // pred_check
          %p238 = pneg %p76
        $region42: #{tpu_custom_call.1} parent=35 // pred_check_branch
          %240 = sbr.rel (%p238) target = $region44
        $region43: #{tpu_custom_call.1} parent=35 // pred_region
          %241 = dma.done [#allocation6], 256
        $region44: #{tpu_custom_call.1} parent=35 // pred_fallthru
          _
        // Predicated region
        $region45: #{tpu_custom_call.1} parent=35 // pred_check
          %p242 = pneg %p123
        $region46: #{tpu_custom_call.1} parent=35 // pred_check_branch
          %244 = sbr.rel (%p242) target = $region48
        $region47: #{tpu_custom_call.1} parent=35 // pred_region
          %245 = dma.done [#allocation6], 1024
        $region48: #{tpu_custom_call.1} parent=35 // pred_fallthru
          _
        %s246 = sand.u32 %s42, 1
        %s247 = scalar_lea.sflag [#allocation3], %s246
        %s248 = sand.u32 %s42, 1
        %s249 = smul.addr %s248, 216
        %s250 = scalar_lea.vmem [#allocation2], %s249
        %p251 = pneg %p55
        %p252 = pneg %p52
        %p253 = pneg %p76
        %p254 = pneg %p73
        %p255 = pneg %p97
        %p256 = pneg %p94
        %p257 = pneg %p123
        %p258 = pneg %p120
        %p259 = pneg %p151
        %p260 = pneg %p148
        %s261 = sand.u32 %s138, 1
        %s262 = scalar_lea.sflag [#allocation4], %s261
        %s263 = sand.u32 %s138, 1
        %s264 = smul.addr %s263, 128
        %s265 = scalar_lea.vmem [#allocation8], %s264
        %s266 = smul.u32 32, %s26
        %v268 = vld [vmem:[%s233] sm:$0xf]
        %v269 = vld [vmem:[%s233 + $0x4] sm:$0xf]
        %v270 = vld [vmem:[%s233 + $0x8] sm:$0xf]
        %v271 = vld [vmem:[%s233 + $0xc] sm:$0xf]
        %v272 = vld [vmem:[%s233 + $0x10] sm:$0xf]
        %v273 = vld [vmem:[%s233 + $0x14] sm:$0xf]
        %v274 = vld [vmem:[%s233 + $0x18] sm:$0xf]
        %v275 = vld [vmem:[%s233 + $0x1c] sm:$0xf]
        %v276 = vld [vmem:[%s233 + $0x20] sm:$0xf]
        %v277 = vld [vmem:[%s233 + $0x24] sm:$0xf]
        %v278 = vld [vmem:[%s233 + $0x28] sm:$0xf]
        %v279 = vld [vmem:[%s233 + $0x2c] sm:$0xf]
        %v280 = vld [vmem:[%s233 + $0x30] sm:$0xf]
        %v281 = vld [vmem:[%s233 + $0x34] sm:$0xf]
        %v282 = vld [vmem:[%s233 + $0x38] sm:$0xf]
        %v283 = vld [vmem:[%s233 + $0x3c] sm:$0xf]
        %v284 = vld [vmem:[%s233 + $0x40] sm:$0xf]
        %v285 = vld [vmem:[%s233 + $0x44] sm:$0xf]
        %v286 = vld [vmem:[%s233 + $0x48] sm:$0xf]
        %v287 = vld [vmem:[%s233 + $0x4c] sm:$0xf]
        %v288 = vld [vmem:[%s233 + $0x50] sm:$0xf]
        %v289 = vld [vmem:[%s233 + $0x54] sm:$0xf]
        %v290 = vld [vmem:[%s233 + $0x58] sm:$0xf]
        %v291 = vld [vmem:[%s233 + $0x5c] sm:$0xf]
        %v292 = vld [vmem:[%s233 + $0x60] sm:$0xf]
        %v293 = vld [vmem:[%s233 + $0x64] sm:$0xf]
        %v294 = vld [vmem:[%s233 + $0x68] sm:$0xf]
        %v295 = vld [vmem:[%s233 + $0x6c] sm:$0xf]
        %v296 = vld [vmem:[%s233 + $0x70] sm:$0xf]
        %v297 = vld [vmem:[%s233 + $0x74] sm:$0xf]
        %v298 = vld [vmem:[%s233 + $0x78] sm:$0xf]
        %v299 = vld [vmem:[%s233 + $0x7c] sm:$0xf]
        %v300 = vld [vmem:[%s233 + $0x80] sm:$0xf]
        %v301 = vld [vmem:[%s233 + $0x84] sm:$0xf]
        %v302 = vld [vmem:[%s233 + $0x88] sm:$0xf]
        %v303 = vld [vmem:[%s233 + $0x8c] sm:$0xf]
        %v304 = vld [vmem:[%s233 + $0x90] sm:$0xf]
        %v305 = vld [vmem:[%s233 + $0x94] sm:$0xf]
        %v306 = vld [vmem:[%s233 + $0x98] sm:$0xf]
        %v307 = vld [vmem:[%s233 + $0x9c] sm:$0xf]
        %v308 = vld [vmem:[%s233 + $0xa0] sm:$0xf]
        %v309 = vld [vmem:[%s233 + $0xa4] sm:$0xf]
        %v310 = vld [vmem:[%s233 + $0xa8] sm:$0xf]
        %v311 = vld [vmem:[%s233 + $0xac] sm:$0xf]
        %v312 = vld [vmem:[%s233 + $0xb0] sm:$0xf]
        %v313 = vld [vmem:[%s233 + $0xb4] sm:$0xf]
        %v314 = vld [vmem:[%s233 + $0xb8] sm:$0xf]
        %v315 = vld [vmem:[%s233 + $0xbc] sm:$0xf]
        %v316 = vunpack.c.l.bf16 %v268
        %v317 = vunpack.c.l.bf16 %v269
        %v318 = vunpack.c.l.bf16 %v270
        %v319 = vunpack.c.l.bf16 %v271
        %v320 = vunpack.c.l.bf16 %v272
        %v321 = vunpack.c.l.bf16 %v273
        %v322 = vunpack.c.l.bf16 %v274
        %v323 = vunpack.c.l.bf16 %v275
        %v324 = vunpack.c.l.bf16 %v276
        %v325 = vunpack.c.l.bf16 %v277
        %v326 = vunpack.c.l.bf16 %v278
        %v327 = vunpack.c.l.bf16 %v279
        %v328 = vunpack.c.l.bf16 %v280
        %v329 = vunpack.c.l.bf16 %v281
        %v330 = vunpack.c.l.bf16 %v282
        %v331 = vunpack.c.l.bf16 %v283
        %v332 = vunpack.c.l.bf16 %v284
        %v333 = vunpack.c.l.bf16 %v285
        %v334 = vunpack.c.l.bf16 %v286
        %v335 = vunpack.c.l.bf16 %v287
        %v336 = vunpack.c.l.bf16 %v288
        %v337 = vunpack.c.l.bf16 %v289
        %v338 = vunpack.c.l.bf16 %v290
        %v339 = vunpack.c.l.bf16 %v291
        %v340 = vunpack.c.l.bf16 %v292
        %v341 = vunpack.c.l.bf16 %v293
        %v342 = vunpack.c.l.bf16 %v294
        %v343 = vunpack.c.l.bf16 %v295
        %v344 = vunpack.c.l.bf16 %v296
        %v345 = vunpack.c.l.bf16 %v297
        %v346 = vunpack.c.l.bf16 %v298
        %v347 = vunpack.c.l.bf16 %v299
        %v348 = vunpack.c.l.bf16 %v300
        %v349 = vunpack.c.l.bf16 %v301
        %v350 = vunpack.c.l.bf16 %v302
        %v351 = vunpack.c.l.bf16 %v303
        %v352 = vunpack.c.l.bf16 %v304
        %v353 = vunpack.c.l.bf16 %v305
        %v354 = vunpack.c.l.bf16 %v306
        %v355 = vunpack.c.l.bf16 %v307
        %v356 = vunpack.c.l.bf16 %v308
        %v357 = vunpack.c.l.bf16 %v309
        %v358 = vunpack.c.l.bf16 %v310
        %v359 = vunpack.c.l.bf16 %v311
        %v360 = vunpack.c.l.bf16 %v312
        %v361 = vunpack.c.l.bf16 %v313
        %v362 = vunpack.c.l.bf16 %v314
        %v363 = vunpack.c.l.bf16 %v315
        %v364 = vld [vmem:[#allocation5] sm:$0x1]
        %v365 = vlaneseq
        %v366 = vshrl.u32 %v365, 7
        %v367 = vsub.s32 0, %v366
        %v368 = vrot.slane %v364, %v367
        %v369 = vmul.f32 %v316, %v368
        %v370 = vmul.f32 %v317, %v368
        %v371 = vmul.f32 %v319, %v368
        %v372 = vmul.f32 %v320, %v368
        %v373 = vmul.f32 %v322, %v368
        %v374 = vmul.f32 %v323, %v368
        %v375 = vmul.f32 %v325, %v368
        %v376 = vmul.f32 %v326, %v368
        %v377 = vmul.f32 %v328, %v368
        %v378 = vmul.f32 %v329, %v368
        %v379 = vmul.f32 %v331, %v368
        %v380 = vmul.f32 %v332, %v368
        %v381 = vmul.f32 %v334, %v368
        %v382 = vmul.f32 %v335, %v368
        %v383 = vmul.f32 %v337, %v368
        %v384 = vmul.f32 %v338, %v368
        %v385 = vmul.f32 %v340, %v368
        %v386 = vmul.f32 %v341, %v368
        %v387 = vmul.f32 %v343, %v368
        %v388 = vmul.f32 %v344, %v368
        %v389 = vmul.f32 %v346, %v368
        %v390 = vmul.f32 %v347, %v368
        %v391 = vmul.f32 %v349, %v368
        %v392 = vmul.f32 %v350, %v368
        %v393 = vmul.f32 %v352, %v368
        %v394 = vmul.f32 %v353, %v368
        %v395 = vmul.f32 %v355, %v368
        %v396 = vmul.f32 %v356, %v368
        %v397 = vmul.f32 %v358, %v368
        %v398 = vmul.f32 %v359, %v368
        %v399 = vmul.f32 %v361, %v368
        %v400 = vmul.f32 %v362, %v368
        %v401 = vld [vmem:[#allocation5 + $0x1] sm:$0x1]
        %v402 = vlaneseq
        %v403 = vshrl.u32 %v402, 7
        %v404 = vsub.s32 0, %v403
        %v405 = vrot.slane %v401, %v404
        %v406 = vmul.f32 %v316, %v405
        %v407 = vmul.f32 %v317, %v405
        %v408 = vmul.f32 %v318, %v405
        %v409 = vmul.f32 %v319, %v405
        %v410 = vmul.f32 %v320, %v405
        %v411 = vmul.f32 %v321, %v405
        %v412 = vmul.f32 %v322, %v405
        %v413 = vmul.f32 %v323, %v405
        %v414 = vmul.f32 %v324, %v405
        %v415 = vmul.f32 %v325, %v405
        %v416 = vmul.f32 %v326, %v405
        %v417 = vmul.f32 %v327, %v405
        %v418 = vmul.f32 %v328, %v405
        %v419 = vmul.f32 %v329, %v405
        %v420 = vmul.f32 %v330, %v405
        %v421 = vmul.f32 %v331, %v405
        %v422 = vmul.f32 %v332, %v405
        %v423 = vmul.f32 %v333, %v405
        %v424 = vmul.f32 %v334, %v405
        %v425 = vmul.f32 %v335, %v405
        %v426 = vmul.f32 %v336, %v405
        %v427 = vmul.f32 %v337, %v405
        %v428 = vmul.f32 %v338, %v405
        %v429 = vmul.f32 %v339, %v405
        %v430 = vmul.f32 %v340, %v405
        %v431 = vmul.f32 %v341, %v405
        %v432 = vmul.f32 %v342, %v405
        %v433 = vmul.f32 %v343, %v405
        %v434 = vmul.f32 %v344, %v405
        %v435 = vmul.f32 %v345, %v405
        %v436 = vmul.f32 %v346, %v405
        %v437 = vmul.f32 %v347, %v405
        %v438 = vmul.f32 %v348, %v405
        %v439 = vmul.f32 %v349, %v405
        %v440 = vmul.f32 %v350, %v405
        %v441 = vmul.f32 %v351, %v405
        %v442 = vmul.f32 %v352, %v405
        %v443 = vmul.f32 %v353, %v405
        %v444 = vmul.f32 %v354, %v405
        %v445 = vmul.f32 %v355, %v405
        %v446 = vmul.f32 %v356, %v405
        %v447 = vmul.f32 %v357, %v405
        %v448 = vmul.f32 %v358, %v405
        %v449 = vmul.f32 %v359, %v405
        %v450 = vmul.f32 %v360, %v405
        %v451 = vmul.f32 %v361, %v405
        %v452 = vmul.f32 %v362, %v405
        %v453 = vmul.f32 %v363, %v405
        %vm502 = vcmask 1046528
        %v503 = vrot.slane %v406, 1
        %v504 = vrot.slane %v407, 1
        %v505 = vsel %vm502, %v503, %v504
        %v506 = vrot.slane %v408, 1
        %v507 = vsel %vm502, %v504, %v506
        %v508 = vrot.slane %v409, 1
        %v509 = vrot.slane %v410, 1
        %v510 = vsel %vm502, %v508, %v509
        %v511 = vrot.slane %v411, 1
        %v512 = vsel %vm502, %v509, %v511
        %v513 = vrot.slane %v412, 1
        %v514 = vrot.slane %v413, 1
        %v515 = vsel %vm502, %v513, %v514
        %v516 = vrot.slane %v414, 1
        %v517 = vsel %vm502, %v514, %v516
        %v518 = vrot.slane %v415, 1
        %v519 = vrot.slane %v416, 1
        %v520 = vsel %vm502, %v518, %v519
        %v521 = vrot.slane %v417, 1
        %v522 = vsel %vm502, %v519, %v521
        %v523 = vrot.slane %v418, 1
        %v524 = vrot.slane %v419, 1
        %v525 = vsel %vm502, %v523, %v524
        %v526 = vrot.slane %v420, 1
        %v527 = vsel %vm502, %v524, %v526
        %v528 = vrot.slane %v421, 1
        %v529 = vrot.slane %v422, 1
        %v530 = vsel %vm502, %v528, %v529
        %v531 = vrot.slane %v423, 1
        %v532 = vsel %vm502, %v529, %v531
        %v533 = vrot.slane %v424, 1
        %v534 = vrot.slane %v425, 1
        %v535 = vsel %vm502, %v533, %v534
        %v536 = vrot.slane %v426, 1
        %v537 = vsel %vm502, %v534, %v536
        %v538 = vrot.slane %v427, 1
        %v539 = vrot.slane %v428, 1
        %v540 = vsel %vm502, %v538, %v539
        %v541 = vrot.slane %v429, 1
        %v542 = vsel %vm502, %v539, %v541
        %v543 = vrot.slane %v430, 1
        %v544 = vrot.slane %v431, 1
        %v545 = vsel %vm502, %v543, %v544
        %v546 = vrot.slane %v432, 1
        %v547 = vsel %vm502, %v544, %v546
        %v548 = vrot.slane %v433, 1
        %v549 = vrot.slane %v434, 1
        %v550 = vsel %vm502, %v548, %v549
        %v551 = vrot.slane %v435, 1
        %v552 = vsel %vm502, %v549, %v551
        %v553 = vrot.slane %v436, 1
        %v554 = vrot.slane %v437, 1
        %v555 = vsel %vm502, %v553, %v554
        %v556 = vrot.slane %v438, 1
        %v557 = vsel %vm502, %v554, %v556
        %v558 = vrot.slane %v439, 1
        %v559 = vrot.slane %v440, 1
        %v560 = vsel %vm502, %v558, %v559
        %v561 = vrot.slane %v441, 1
        %v562 = vsel %vm502, %v559, %v561
        %v563 = vrot.slane %v442, 1
        %v564 = vrot.slane %v443, 1
        %v565 = vsel %vm502, %v563, %v564
        %v566 = vrot.slane %v444, 1
        %v567 = vsel %vm502, %v564, %v566
        %v568 = vrot.slane %v445, 1
        %v569 = vrot.slane %v446, 1
        %v570 = vsel %vm502, %v568, %v569
        %v571 = vrot.slane %v447, 1
        %v572 = vsel %vm502, %v569, %v571
        %v573 = vrot.slane %v448, 1
        %v574 = vrot.slane %v449, 1
        %v575 = vsel %vm502, %v573, %v574
        %v576 = vrot.slane %v450, 1
        %v577 = vsel %vm502, %v574, %v576
        %v578 = vrot.slane %v451, 1
        %v579 = vrot.slane %v452, 1
        %v580 = vsel %vm502, %v578, %v579
        %v581 = vrot.slane %v453, 1
        %v582 = vsel %vm502, %v579, %v581
        %v615 = vadd.f32 %v369, %v505
        %v616 = vadd.f32 %v370, %v507
        %v617 = vadd.f32 %v371, %v510
        %v618 = vadd.f32 %v372, %v512
        %v619 = vadd.f32 %v373, %v515
        %v620 = vadd.f32 %v374, %v517
        %v621 = vadd.f32 %v375, %v520
        %v622 = vadd.f32 %v376, %v522
        %v623 = vadd.f32 %v377, %v525
        %v624 = vadd.f32 %v378, %v527
        %v625 = vadd.f32 %v379, %v530
        %v626 = vadd.f32 %v380, %v532
        %v627 = vadd.f32 %v381, %v535
        %v628 = vadd.f32 %v382, %v537
        %v629 = vadd.f32 %v383, %v540
        %v630 = vadd.f32 %v384, %v542
        %v631 = vadd.f32 %v385, %v545
        %v632 = vadd.f32 %v386, %v547
        %v633 = vadd.f32 %v387, %v550
        %v634 = vadd.f32 %v388, %v552
        %v635 = vadd.f32 %v389, %v555
        %v636 = vadd.f32 %v390, %v557
        %v637 = vadd.f32 %v391, %v560
        %v638 = vadd.f32 %v392, %v562
        %v639 = vadd.f32 %v393, %v565
        %v640 = vadd.f32 %v394, %v567
        %v641 = vadd.f32 %v395, %v570
        %v642 = vadd.f32 %v396, %v572
        %v643 = vadd.f32 %v397, %v575
        %v644 = vadd.f32 %v398, %v577
        %v645 = vadd.f32 %v399, %v580
        %v646 = vadd.f32 %v400, %v582
        %v647 = vld [vmem:[#allocation5 + $0x2] sm:$0x1]
        %v648 = vlaneseq
        %v649 = vshrl.u32 %v648, 7
        %v650 = vsub.s32 0, %v649
        %v651 = vrot.slane %v647, %v650
        %v652 = vmul.f32 %v316, %v651
        %v653 = vmul.f32 %v317, %v651
        %v654 = vmul.f32 %v318, %v651
        %v655 = vmul.f32 %v319, %v651
        %v656 = vmul.f32 %v320, %v651
        %v657 = vmul.f32 %v321, %v651
        %v658 = vmul.f32 %v322, %v651
        %v659 = vmul.f32 %v323, %v651
        %v660 = vmul.f32 %v324, %v651
        %v661 = vmul.f32 %v325, %v651
        %v662 = vmul.f32 %v326, %v651
        %v663 = vmul.f32 %v327, %v651
        %v664 = vmul.f32 %v328, %v651
        %v665 = vmul.f32 %v329, %v651
        %v666 = vmul.f32 %v330, %v651
        %v667 = vmul.f32 %v331, %v651
        %v668 = vmul.f32 %v332, %v651
        %v669 = vmul.f32 %v333, %v651
        %v670 = vmul.f32 %v334, %v651
        %v671 = vmul.f32 %v335, %v651
        %v672 = vmul.f32 %v336, %v651
        %v673 = vmul.f32 %v337, %v651
        %v674 = vmul.f32 %v338, %v651
        %v675 = vmul.f32 %v339, %v651
        %v676 = vmul.f32 %v340, %v651
        %v677 = vmul.f32 %v341, %v651
        %v678 = vmul.f32 %v342, %v651
        %v679 = vmul.f32 %v343, %v651
        %v680 = vmul.f32 %v344, %v651
        %v681 = vmul.f32 %v345, %v651
        %v682 = vmul.f32 %v346, %v651
        %v683 = vmul.f32 %v347, %v651
        %v684 = vmul.f32 %v348, %v651
        %v685 = vmul.f32 %v349, %v651
        %v686 = vmul.f32 %v350, %v651
        %v687 = vmul.f32 %v351, %v651
        %v688 = vmul.f32 %v352, %v651
        %v689 = vmul.f32 %v353, %v651
        %v690 = vmul.f32 %v354, %v651
        %v691 = vmul.f32 %v355, %v651
        %v692 = vmul.f32 %v356, %v651
        %v693 = vmul.f32 %v357, %v651
        %v694 = vmul.f32 %v358, %v651
        %v695 = vmul.f32 %v359, %v651
        %v696 = vmul.f32 %v360, %v651
        %v697 = vmul.f32 %v361, %v651
        %v698 = vmul.f32 %v362, %v651
        %v699 = vmul.f32 %v363, %v651
        %vm748 = vcmask 1045504
        %v749 = vrot.slane %v652, 2
        %v750 = vrot.slane %v653, 2
        %v751 = vsel %vm748, %v749, %v750
        %v752 = vrot.slane %v654, 2
        %v753 = vsel %vm748, %v750, %v752
        %v754 = vrot.slane %v655, 2
        %v755 = vrot.slane %v656, 2
        %v756 = vsel %vm748, %v754, %v755
        %v757 = vrot.slane %v657, 2
        %v758 = vsel %vm748, %v755, %v757
        %v759 = vrot.slane %v658, 2
        %v760 = vrot.slane %v659, 2
        %v761 = vsel %vm748, %v759, %v760
        %v762 = vrot.slane %v660, 2
        %v763 = vsel %vm748, %v760, %v762
        %v764 = vrot.slane %v661, 2
        %v765 = vrot.slane %v662, 2
        %v766 = vsel %vm748, %v764, %v765
        %v767 = vrot.slane %v663, 2
        %v768 = vsel %vm748, %v765, %v767
        %v769 = vrot.slane %v664, 2
        %v770 = vrot.slane %v665, 2
        %v771 = vsel %vm748, %v769, %v770
        %v772 = vrot.slane %v666, 2
        %v773 = vsel %vm748, %v770, %v772
        %v774 = vrot.slane %v667, 2
        %v775 = vrot.slane %v668, 2
        %v776 = vsel %vm748, %v774, %v775
        %v777 = vrot.slane %v669, 2
        %v778 = vsel %vm748, %v775, %v777
        %v779 = vrot.slane %v670, 2
        %v780 = vrot.slane %v671, 2
        %v781 = vsel %vm748, %v779, %v780
        %v782 = vrot.slane %v672, 2
        %v783 = vsel %vm748, %v780, %v782
        %v784 = vrot.slane %v673, 2
        %v785 = vrot.slane %v674, 2
        %v786 = vsel %vm748, %v784, %v785
        %v787 = vrot.slane %v675, 2
        %v788 = vsel %vm748, %v785, %v787
        %v789 = vrot.slane %v676, 2
        %v790 = vrot.slane %v677, 2
        %v791 = vsel %vm748, %v789, %v790
        %v792 = vrot.slane %v678, 2
        %v793 = vsel %vm748, %v790, %v792
        %v794 = vrot.slane %v679, 2
        %v795 = vrot.slane %v680, 2
        %v796 = vsel %vm748, %v794, %v795
        %v797 = vrot.slane %v681, 2
        %v798 = vsel %vm748, %v795, %v797
        %v799 = vrot.slane %v682, 2
        %v800 = vrot.slane %v683, 2
        %v801 = vsel %vm748, %v799, %v800
        %v802 = vrot.slane %v684, 2
        %v803 = vsel %vm748, %v800, %v802
        %v804 = vrot.slane %v685, 2
        %v805 = vrot.slane %v686, 2
        %v806 = vsel %vm748, %v804, %v805
        %v807 = vrot.slane %v687, 2
        %v808 = vsel %vm748, %v805, %v807
        %v809 = vrot.slane %v688, 2
        %v810 = vrot.slane %v689, 2
        %v811 = vsel %vm748, %v809, %v810
        %v812 = vrot.slane %v690, 2
        %v813 = vsel %vm748, %v810, %v812
        %v814 = vrot.slane %v691, 2
        %v815 = vrot.slane %v692, 2
        %v816 = vsel %vm748, %v814, %v815
        %v817 = vrot.slane %v693, 2
        %v818 = vsel %vm748, %v815, %v817
        %v819 = vrot.slane %v694, 2
        %v820 = vrot.slane %v695, 2
        %v821 = vsel %vm748, %v819, %v820
        %v822 = vrot.slane %v696, 2
        %v823 = vsel %vm748, %v820, %v822
        %v824 = vrot.slane %v697, 2
        %v825 = vrot.slane %v698, 2
        %v826 = vsel %vm748, %v824, %v825
        %v827 = vrot.slane %v699, 2
        %v828 = vsel %vm748, %v825, %v827
        %v861 = vadd.f32 %v615, %v751
        %v862 = vadd.f32 %v616, %v753
        %v863 = vadd.f32 %v617, %v756
        %v864 = vadd.f32 %v618, %v758
        %v865 = vadd.f32 %v619, %v761
        %v866 = vadd.f32 %v620, %v763
        %v867 = vadd.f32 %v621, %v766
        %v868 = vadd.f32 %v622, %v768
        %v869 = vadd.f32 %v623, %v771
        %v870 = vadd.f32 %v624, %v773
        %v871 = vadd.f32 %v625, %v776
        %v872 = vadd.f32 %v626, %v778
        %v873 = vadd.f32 %v627, %v781
        %v874 = vadd.f32 %v628, %v783
        %v875 = vadd.f32 %v629, %v786
        %v876 = vadd.f32 %v630, %v788
        %v877 = vadd.f32 %v631, %v791
        %v878 = vadd.f32 %v632, %v793
        %v879 = vadd.f32 %v633, %v796
        %v880 = vadd.f32 %v634, %v798
        %v881 = vadd.f32 %v635, %v801
        %v882 = vadd.f32 %v636, %v803
        %v883 = vadd.f32 %v637, %v806
        %v884 = vadd.f32 %v638, %v808
        %v885 = vadd.f32 %v639, %v811
        %v886 = vadd.f32 %v640, %v813
        %v887 = vadd.f32 %v641, %v816
        %v888 = vadd.f32 %v642, %v818
        %v889 = vadd.f32 %v643, %v821
        %v890 = vadd.f32 %v644, %v823
        %v891 = vadd.f32 %v645, %v826
        %v892 = vadd.f32 %v646, %v828
        %s893 = scalar_lea.vmem %s233, 12 [#allocation2]
        %v894 = vld [vmem:[%s893] sm:$0xf]
        %v895 = vld [vmem:[%s893 + $0x4] sm:$0xf]
        %v896 = vld [vmem:[%s893 + $0x8] sm:$0xf]
        %v897 = vld [vmem:[%s893 + $0xc] sm:$0xf]
        %v898 = vld [vmem:[%s893 + $0x10] sm:$0xf]
        %v899 = vld [vmem:[%s893 + $0x14] sm:$0xf]
        %v900 = vld [vmem:[%s893 + $0x18] sm:$0xf]
        %v901 = vld [vmem:[%s893 + $0x1c] sm:$0xf]
        %v902 = vld [vmem:[%s893 + $0x20] sm:$0xf]
        %v903 = vld [vmem:[%s893 + $0x24] sm:$0xf]
        %v904 = vld [vmem:[%s893 + $0x28] sm:$0xf]
        %v905 = vld [vmem:[%s893 + $0x2c] sm:$0xf]
        %v906 = vld [vmem:[%s893 + $0x30] sm:$0xf]
        %v907 = vld [vmem:[%s893 + $0x34] sm:$0xf]
        %v908 = vld [vmem:[%s893 + $0x38] sm:$0xf]
        %v909 = vld [vmem:[%s893 + $0x3c] sm:$0xf]
        %v910 = vld [vmem:[%s893 + $0x40] sm:$0xf]
        %v911 = vld [vmem:[%s893 + $0x44] sm:$0xf]
        %v912 = vld [vmem:[%s893 + $0x48] sm:$0xf]
        %v913 = vld [vmem:[%s893 + $0x4c] sm:$0xf]
        %v914 = vld [vmem:[%s893 + $0x50] sm:$0xf]
        %v915 = vld [vmem:[%s893 + $0x54] sm:$0xf]
        %v916 = vld [vmem:[%s893 + $0x58] sm:$0xf]
        %v917 = vld [vmem:[%s893 + $0x5c] sm:$0xf]
        %v918 = vld [vmem:[%s893 + $0x60] sm:$0xf]
        %v919 = vld [vmem:[%s893 + $0x64] sm:$0xf]
        %v920 = vld [vmem:[%s893 + $0x68] sm:$0xf]
        %v921 = vld [vmem:[%s893 + $0x6c] sm:$0xf]
        %v922 = vld [vmem:[%s893 + $0x70] sm:$0xf]
        %v923 = vld [vmem:[%s893 + $0x74] sm:$0xf]
        %v924 = vld [vmem:[%s893 + $0x78] sm:$0xf]
        %v925 = vld [vmem:[%s893 + $0x7c] sm:$0xf]
        %v926 = vld [vmem:[%s893 + $0x80] sm:$0xf]
        %v927 = vld [vmem:[%s893 + $0x84] sm:$0xf]
        %v928 = vld [vmem:[%s893 + $0x88] sm:$0xf]
        %v929 = vld [vmem:[%s893 + $0x8c] sm:$0xf]
        %v930 = vld [vmem:[%s893 + $0x90] sm:$0xf]
        %v931 = vld [vmem:[%s893 + $0x94] sm:$0xf]
        %v932 = vld [vmem:[%s893 + $0x98] sm:$0xf]
        %v933 = vld [vmem:[%s893 + $0x9c] sm:$0xf]
        %v934 = vld [vmem:[%s893 + $0xa0] sm:$0xf]
        %v935 = vld [vmem:[%s893 + $0xa4] sm:$0xf]
        %v936 = vld [vmem:[%s893 + $0xa8] sm:$0xf]
        %v937 = vld [vmem:[%s893 + $0xac] sm:$0xf]
        %v938 = vld [vmem:[%s893 + $0xb0] sm:$0xf]
        %v939 = vld [vmem:[%s893 + $0xb4] sm:$0xf]
        %v940 = vld [vmem:[%s893 + $0xb8] sm:$0xf]
        %v941 = vld [vmem:[%s893 + $0xbc] sm:$0xf]
        %v942 = vunpack.c.l.bf16 %v894
        %v943 = vunpack.c.l.bf16 %v895
        %v944 = vunpack.c.l.bf16 %v896
        %v945 = vunpack.c.l.bf16 %v897
        %v946 = vunpack.c.l.bf16 %v898
        %v947 = vunpack.c.l.bf16 %v899
        %v948 = vunpack.c.l.bf16 %v900
        %v949 = vunpack.c.l.bf16 %v901
        %v950 = vunpack.c.l.bf16 %v902
        %v951 = vunpack.c.l.bf16 %v903
        %v952 = vunpack.c.l.bf16 %v904
        %v953 = vunpack.c.l.bf16 %v905
        %v954 = vunpack.c.l.bf16 %v906
        %v955 = vunpack.c.l.bf16 %v907
        %v956 = vunpack.c.l.bf16 %v908
        %v957 = vunpack.c.l.bf16 %v909
        %v958 = vunpack.c.l.bf16 %v910
        %v959 = vunpack.c.l.bf16 %v911
        %v960 = vunpack.c.l.bf16 %v912
        %v961 = vunpack.c.l.bf16 %v913
        %v962 = vunpack.c.l.bf16 %v914
        %v963 = vunpack.c.l.bf16 %v915
        %v964 = vunpack.c.l.bf16 %v916
        %v965 = vunpack.c.l.bf16 %v917
        %v966 = vunpack.c.l.bf16 %v918
        %v967 = vunpack.c.l.bf16 %v919
        %v968 = vunpack.c.l.bf16 %v920
        %v969 = vunpack.c.l.bf16 %v921
        %v970 = vunpack.c.l.bf16 %v922
        %v971 = vunpack.c.l.bf16 %v923
        %v972 = vunpack.c.l.bf16 %v924
        %v973 = vunpack.c.l.bf16 %v925
        %v974 = vunpack.c.l.bf16 %v926
        %v975 = vunpack.c.l.bf16 %v927
        %v976 = vunpack.c.l.bf16 %v928
        %v977 = vunpack.c.l.bf16 %v929
        %v978 = vunpack.c.l.bf16 %v930
        %v979 = vunpack.c.l.bf16 %v931
        %v980 = vunpack.c.l.bf16 %v932
        %v981 = vunpack.c.l.bf16 %v933
        %v982 = vunpack.c.l.bf16 %v934
        %v983 = vunpack.c.l.bf16 %v935
        %v984 = vunpack.c.l.bf16 %v936
        %v985 = vunpack.c.l.bf16 %v937
        %v986 = vunpack.c.l.bf16 %v938
        %v987 = vunpack.c.l.bf16 %v939
        %v988 = vunpack.c.l.bf16 %v940
        %v989 = vunpack.c.l.bf16 %v941
        %v990 = vld [vmem:[#allocation5 + $0x3] sm:$0x1]
        %v991 = vlaneseq
        %v992 = vshrl.u32 %v991, 7
        %v993 = vsub.s32 0, %v992
        %v994 = vrot.slane %v990, %v993
        %v995 = vmul.f32 %v942, %v994
        %v996 = vmul.f32 %v943, %v994
        %v997 = vmul.f32 %v945, %v994
        %v998 = vmul.f32 %v946, %v994
        %v999 = vmul.f32 %v948, %v994
        %v1000 = vmul.f32 %v949, %v994
        %v1001 = vmul.f32 %v951, %v994
        %v1002 = vmul.f32 %v952, %v994
        %v1003 = vmul.f32 %v954, %v994
        %v1004 = vmul.f32 %v955, %v994
        %v1005 = vmul.f32 %v957, %v994
        %v1006 = vmul.f32 %v958, %v994
        %v1007 = vmul.f32 %v960, %v994
        %v1008 = vmul.f32 %v961, %v994
        %v1009 = vmul.f32 %v963, %v994
        %v1010 = vmul.f32 %v964, %v994
        %v1011 = vmul.f32 %v966, %v994
        %v1012 = vmul.f32 %v967, %v994
        %v1013 = vmul.f32 %v969, %v994
        %v1014 = vmul.f32 %v970, %v994
        %v1015 = vmul.f32 %v972, %v994
        %v1016 = vmul.f32 %v973, %v994
        %v1017 = vmul.f32 %v975, %v994
        %v1018 = vmul.f32 %v976, %v994
        %v1019 = vmul.f32 %v978, %v994
        %v1020 = vmul.f32 %v979, %v994
        %v1021 = vmul.f32 %v981, %v994
        %v1022 = vmul.f32 %v982, %v994
        %v1023 = vmul.f32 %v984, %v994
        %v1024 = vmul.f32 %v985, %v994
        %v1025 = vmul.f32 %v987, %v994
        %v1026 = vmul.f32 %v988, %v994
        %v1027 = vadd.f32 %v861, %v995
        %v1028 = vadd.f32 %v862, %v996
        %v1029 = vadd.f32 %v863, %v997
        %v1030 = vadd.f32 %v864, %v998
        %v1031 = vadd.f32 %v865, %v999
        %v1032 = vadd.f32 %v866, %v1000
        %v1033 = vadd.f32 %v867, %v1001
        %v1034 = vadd.f32 %v868, %v1002
        %v1035 = vadd.f32 %v869, %v1003
        %v1036 = vadd.f32 %v870, %v1004
        %v1037 = vadd.f32 %v871, %v1005
        %v1038 = vadd.f32 %v872, %v1006
        %v1039 = vadd.f32 %v873, %v1007
        %v1040 = vadd.f32 %v874, %v1008
        %v1041 = vadd.f32 %v875, %v1009
        %v1042 = vadd.f32 %v876, %v1010
        %v1043 = vadd.f32 %v877, %v1011
        %v1044 = vadd.f32 %v878, %v1012
        %v1045 = vadd.f32 %v879, %v1013
        %v1046 = vadd.f32 %v880, %v1014
        %v1047 = vadd.f32 %v881, %v1015
        %v1048 = vadd.f32 %v882, %v1016
        %v1049 = vadd.f32 %v883, %v1017
        %v1050 = vadd.f32 %v884, %v1018
        %v1051 = vadd.f32 %v885, %v1019
        %v1052 = vadd.f32 %v886, %v1020
        %v1053 = vadd.f32 %v887, %v1021
        %v1054 = vadd.f32 %v888, %v1022
        %v1055 = vadd.f32 %v889, %v1023
        %v1056 = vadd.f32 %v890, %v1024
        %v1057 = vadd.f32 %v891, %v1025
        %v1058 = vadd.f32 %v892, %v1026
        %v1059 = vld [vmem:[#allocation5 + $0x4] sm:$0x1]
        %v1060 = vlaneseq
        %v1061 = vshrl.u32 %v1060, 7
        %v1062 = vsub.s32 0, %v1061
        %v1063 = vrot.slane %v1059, %v1062
        %v1064 = vmul.f32 %v942, %v1063
        %v1065 = vmul.f32 %v943, %v1063
        %v1066 = vmul.f32 %v944, %v1063
        %v1067 = vmul.f32 %v945, %v1063
        %v1068 = vmul.f32 %v946, %v1063
        %v1069 = vmul.f32 %v947, %v1063
        %v1070 = vmul.f32 %v948, %v1063
        %v1071 = vmul.f32 %v949, %v1063
        %v1072 = vmul.f32 %v950, %v1063
        %v1073 = vmul.f32 %v951, %v1063
        %v1074 = vmul.f32 %v952, %v1063
        %v1075 = vmul.f32 %v953, %v1063
        %v1076 = vmul.f32 %v954, %v1063
        %v1077 = vmul.f32 %v955, %v1063
        %v1078 = vmul.f32 %v956, %v1063
        %v1079 = vmul.f32 %v957, %v1063
        %v1080 = vmul.f32 %v958, %v1063
        %v1081 = vmul.f32 %v959, %v1063
        %v1082 = vmul.f32 %v960, %v1063
        %v1083 = vmul.f32 %v961, %v1063
        %v1084 = vmul.f32 %v962, %v1063
        %v1085 = vmul.f32 %v963, %v1063
        %v1086 = vmul.f32 %v964, %v1063
        %v1087 = vmul.f32 %v965, %v1063
        %v1088 = vmul.f32 %v966, %v1063
        %v1089 = vmul.f32 %v967, %v1063
        %v1090 = vmul.f32 %v968, %v1063
        %v1091 = vmul.f32 %v969, %v1063
        %v1092 = vmul.f32 %v970, %v1063
        %v1093 = vmul.f32 %v971, %v1063
        %v1094 = vmul.f32 %v972, %v1063
        %v1095 = vmul.f32 %v973, %v1063
        %v1096 = vmul.f32 %v974, %v1063
        %v1097 = vmul.f32 %v975, %v1063
        %v1098 = vmul.f32 %v976, %v1063
        %v1099 = vmul.f32 %v977, %v1063
        %v1100 = vmul.f32 %v978, %v1063
        %v1101 = vmul.f32 %v979, %v1063
        %v1102 = vmul.f32 %v980, %v1063
        %v1103 = vmul.f32 %v981, %v1063
        %v1104 = vmul.f32 %v982, %v1063
        %v1105 = vmul.f32 %v983, %v1063
        %v1106 = vmul.f32 %v984, %v1063
        %v1107 = vmul.f32 %v985, %v1063
        %v1108 = vmul.f32 %v986, %v1063
        %v1109 = vmul.f32 %v987, %v1063
        %v1110 = vmul.f32 %v988, %v1063
        %v1111 = vmul.f32 %v989, %v1063
        %v1160 = vrot.slane %v1064, 1
        %v1161 = vrot.slane %v1065, 1
        %v1162 = vsel %vm502, %v1160, %v1161
        %v1163 = vrot.slane %v1066, 1
        %v1164 = vsel %vm502, %v1161, %v1163
        %v1165 = vrot.slane %v1067, 1
        %v1166 = vrot.slane %v1068, 1
        %v1167 = vsel %vm502, %v1165, %v1166
        %v1168 = vrot.slane %v1069, 1
        %v1169 = vsel %vm502, %v1166, %v1168
        %v1170 = vrot.slane %v1070, 1
        %v1171 = vrot.slane %v1071, 1
        %v1172 = vsel %vm502, %v1170, %v1171
        %v1173 = vrot.slane %v1072, 1
        %v1174 = vsel %vm502, %v1171, %v1173
        %v1175 = vrot.slane %v1073, 1
        %v1176 = vrot.slane %v1074, 1
        %v1177 = vsel %vm502, %v1175, %v1176
        %v1178 = vrot.slane %v1075, 1
        %v1179 = vsel %vm502, %v1176, %v1178
        %v1180 = vrot.slane %v1076, 1
        %v1181 = vrot.slane %v1077, 1
        %v1182 = vsel %vm502, %v1180, %v1181
        %v1183 = vrot.slane %v1078, 1
        %v1184 = vsel %vm502, %v1181, %v1183
        %v1185 = vrot.slane %v1079, 1
        %v1186 = vrot.slane %v1080, 1
        %v1187 = vsel %vm502, %v1185, %v1186
        %v1188 = vrot.slane %v1081, 1
        %v1189 = vsel %vm502, %v1186, %v1188
        %v1190 = vrot.slane %v1082, 1
        %v1191 = vrot.slane %v1083, 1
        %v1192 = vsel %vm502, %v1190, %v1191
        %v1193 = vrot.slane %v1084, 1
        %v1194 = vsel %vm502, %v1191, %v1193
        %v1195 = vrot.slane %v1085, 1
        %v1196 = vrot.slane %v1086, 1
        %v1197 = vsel %vm502, %v1195, %v1196
        %v1198 = vrot.slane %v1087, 1
        %v1199 = vsel %vm502, %v1196, %v1198
        %v1200 = vrot.slane %v1088, 1
        %v1201 = vrot.slane %v1089, 1
        %v1202 = vsel %vm502, %v1200, %v1201
        %v1203 = vrot.slane %v1090, 1
        %v1204 = vsel %vm502, %v1201, %v1203
        %v1205 = vrot.slane %v1091, 1
        %v1206 = vrot.slane %v1092, 1
        %v1207 = vsel %vm502, %v1205, %v1206
        %v1208 = vrot.slane %v1093, 1
        %v1209 = vsel %vm502, %v1206, %v1208
        %v1210 = vrot.slane %v1094, 1
        %v1211 = vrot.slane %v1095, 1
        %v1212 = vsel %vm502, %v1210, %v1211
        %v1213 = vrot.slane %v1096, 1
        %v1214 = vsel %vm502, %v1211, %v1213
        %v1215 = vrot.slane %v1097, 1
        %v1216 = vrot.slane %v1098, 1
        %v1217 = vsel %vm502, %v1215, %v1216
        %v1218 = vrot.slane %v1099, 1
        %v1219 = vsel %vm502, %v1216, %v1218
        %v1220 = vrot.slane %v1100, 1
        %v1221 = vrot.slane %v1101, 1
        %v1222 = vsel %vm502, %v1220, %v1221
        %v1223 = vrot.slane %v1102, 1
        %v1224 = vsel %vm502, %v1221, %v1223
        %v1225 = vrot.slane %v1103, 1
        %v1226 = vrot.slane %v1104, 1
        %v1227 = vsel %vm502, %v1225, %v1226
        %v1228 = vrot.slane %v1105, 1
        %v1229 = vsel %vm502, %v1226, %v1228
        %v1230 = vrot.slane %v1106, 1
        %v1231 = vrot.slane %v1107, 1
        %v1232 = vsel %vm502, %v1230, %v1231
        %v1233 = vrot.slane %v1108, 1
        %v1234 = vsel %vm502, %v1231, %v1233
        %v1235 = vrot.slane %v1109, 1
        %v1236 = vrot.slane %v1110, 1
        %v1237 = vsel %vm502, %v1235, %v1236
        %v1238 = vrot.slane %v1111, 1
        %v1239 = vsel %vm502, %v1236, %v1238
        %v1272 = vadd.f32 %v1027, %v1162
        %v1273 = vadd.f32 %v1028, %v1164
        %v1274 = vadd.f32 %v1029, %v1167
        %v1275 = vadd.f32 %v1030, %v1169
        %v1276 = vadd.f32 %v1031, %v1172
        %v1277 = vadd.f32 %v1032, %v1174
        %v1278 = vadd.f32 %v1033, %v1177
        %v1279 = vadd.f32 %v1034, %v1179
        %v1280 = vadd.f32 %v1035, %v1182
        %v1281 = vadd.f32 %v1036, %v1184
        %v1282 = vadd.f32 %v1037, %v1187
        %v1283 = vadd.f32 %v1038, %v1189
        %v1284 = vadd.f32 %v1039, %v1192
        %v1285 = vadd.f32 %v1040, %v1194
        %v1286 = vadd.f32 %v1041, %v1197
        %v1287 = vadd.f32 %v1042, %v1199
        %v1288 = vadd.f32 %v1043, %v1202
        %v1289 = vadd.f32 %v1044, %v1204
        %v1290 = vadd.f32 %v1045, %v1207
        %v1291 = vadd.f32 %v1046, %v1209
        %v1292 = vadd.f32 %v1047, %v1212
        %v1293 = vadd.f32 %v1048, %v1214
        %v1294 = vadd.f32 %v1049, %v1217
        %v1295 = vadd.f32 %v1050, %v1219
        %v1296 = vadd.f32 %v1051, %v1222
        %v1297 = vadd.f32 %v1052, %v1224
        %v1298 = vadd.f32 %v1053, %v1227
        %v1299 = vadd.f32 %v1054, %v1229
        %v1300 = vadd.f32 %v1055, %v1232
        %v1301 = vadd.f32 %v1056, %v1234
        %v1302 = vadd.f32 %v1057, %v1237
        %v1303 = vadd.f32 %v1058, %v1239
        %v1304 = vld [vmem:[#allocation5 + $0x5] sm:$0x1]
        %v1305 = vlaneseq
        %v1306 = vshrl.u32 %v1305, 7
        %v1307 = vsub.s32 0, %v1306
        %v1308 = vrot.slane %v1304, %v1307
        %v1309 = vmul.f32 %v942, %v1308
        %v1310 = vmul.f32 %v943, %v1308
        %v1311 = vmul.f32 %v944, %v1308
        %v1312 = vmul.f32 %v945, %v1308
        %v1313 = vmul.f32 %v946, %v1308
        %v1314 = vmul.f32 %v947, %v1308
        %v1315 = vmul.f32 %v948, %v1308
        %v1316 = vmul.f32 %v949, %v1308
        %v1317 = vmul.f32 %v950, %v1308
        %v1318 = vmul.f32 %v951, %v1308
        %v1319 = vmul.f32 %v952, %v1308
        %v1320 = vmul.f32 %v953, %v1308
        %v1321 = vmul.f32 %v954, %v1308
        %v1322 = vmul.f32 %v955, %v1308
        %v1323 = vmul.f32 %v956, %v1308
        %v1324 = vmul.f32 %v957, %v1308
        %v1325 = vmul.f32 %v958, %v1308
        %v1326 = vmul.f32 %v959, %v1308
        %v1327 = vmul.f32 %v960, %v1308
        %v1328 = vmul.f32 %v961, %v1308
        %v1329 = vmul.f32 %v962, %v1308
        %v1330 = vmul.f32 %v963, %v1308
        %v1331 = vmul.f32 %v964, %v1308
        %v1332 = vmul.f32 %v965, %v1308
        %v1333 = vmul.f32 %v966, %v1308
        %v1334 = vmul.f32 %v967, %v1308
        %v1335 = vmul.f32 %v968, %v1308
        %v1336 = vmul.f32 %v969, %v1308
        %v1337 = vmul.f32 %v970, %v1308
        %v1338 = vmul.f32 %v971, %v1308
        %v1339 = vmul.f32 %v972, %v1308
        %v1340 = vmul.f32 %v973, %v1308
        %v1341 = vmul.f32 %v974, %v1308
        %v1342 = vmul.f32 %v975, %v1308
        %v1343 = vmul.f32 %v976, %v1308
        %v1344 = vmul.f32 %v977, %v1308
        %v1345 = vmul.f32 %v978, %v1308
        %v1346 = vmul.f32 %v979, %v1308
        %v1347 = vmul.f32 %v980, %v1308
        %v1348 = vmul.f32 %v981, %v1308
        %v1349 = vmul.f32 %v982, %v1308
        %v1350 = vmul.f32 %v983, %v1308
        %v1351 = vmul.f32 %v984, %v1308
        %v1352 = vmul.f32 %v985, %v1308
        %v1353 = vmul.f32 %v986, %v1308
        %v1354 = vmul.f32 %v987, %v1308
        %v1355 = vmul.f32 %v988, %v1308
        %v1356 = vmul.f32 %v989, %v1308
        %v1405 = vrot.slane %v1309, 2
        %v1406 = vrot.slane %v1310, 2
        %v1407 = vsel %vm748, %v1405, %v1406
        %v1408 = vrot.slane %v1311, 2
        %v1409 = vsel %vm748, %v1406, %v1408
        %v1410 = vrot.slane %v1312, 2
        %v1411 = vrot.slane %v1313, 2
        %v1412 = vsel %vm748, %v1410, %v1411
        %v1413 = vrot.slane %v1314, 2
        %v1414 = vsel %vm748, %v1411, %v1413
        %v1415 = vrot.slane %v1315, 2
        %v1416 = vrot.slane %v1316, 2
        %v1417 = vsel %vm748, %v1415, %v1416
        %v1418 = vrot.slane %v1317, 2
        %v1419 = vsel %vm748, %v1416, %v1418
        %v1420 = vrot.slane %v1318, 2
        %v1421 = vrot.slane %v1319, 2
        %v1422 = vsel %vm748, %v1420, %v1421
        %v1423 = vrot.slane %v1320, 2
        %v1424 = vsel %vm748, %v1421, %v1423
        %v1425 = vrot.slane %v1321, 2
        %v1426 = vrot.slane %v1322, 2
        %v1427 = vsel %vm748, %v1425, %v1426
        %v1428 = vrot.slane %v1323, 2
        %v1429 = vsel %vm748, %v1426, %v1428
        %v1430 = vrot.slane %v1324, 2
        %v1431 = vrot.slane %v1325, 2
        %v1432 = vsel %vm748, %v1430, %v1431
        %v1433 = vrot.slane %v1326, 2
        %v1434 = vsel %vm748, %v1431, %v1433
        %v1435 = vrot.slane %v1327, 2
        %v1436 = vrot.slane %v1328, 2
        %v1437 = vsel %vm748, %v1435, %v1436
        %v1438 = vrot.slane %v1329, 2
        %v1439 = vsel %vm748, %v1436, %v1438
        %v1440 = vrot.slane %v1330, 2
        %v1441 = vrot.slane %v1331, 2
        %v1442 = vsel %vm748, %v1440, %v1441
        %v1443 = vrot.slane %v1332, 2
        %v1444 = vsel %vm748, %v1441, %v1443
        %v1445 = vrot.slane %v1333, 2
        %v1446 = vrot.slane %v1334, 2
        %v1447 = vsel %vm748, %v1445, %v1446
        %v1448 = vrot.slane %v1335, 2
        %v1449 = vsel %vm748, %v1446, %v1448
        %v1450 = vrot.slane %v1336, 2
        %v1451 = vrot.slane %v1337, 2
        %v1452 = vsel %vm748, %v1450, %v1451
        %v1453 = vrot.slane %v1338, 2
        %v1454 = vsel %vm748, %v1451, %v1453
        %v1455 = vrot.slane %v1339, 2
        %v1456 = vrot.slane %v1340, 2
        %v1457 = vsel %vm748, %v1455, %v1456
        %v1458 = vrot.slane %v1341, 2
        %v1459 = vsel %vm748, %v1456, %v1458
        %v1460 = vrot.slane %v1342, 2
        %v1461 = vrot.slane %v1343, 2
        %v1462 = vsel %vm748, %v1460, %v1461
        %v1463 = vrot.slane %v1344, 2
        %v1464 = vsel %vm748, %v1461, %v1463
        %v1465 = vrot.slane %v1345, 2
        %v1466 = vrot.slane %v1346, 2
        %v1467 = vsel %vm748, %v1465, %v1466
        %v1468 = vrot.slane %v1347, 2
        %v1469 = vsel %vm748, %v1466, %v1468
        %v1470 = vrot.slane %v1348, 2
        %v1471 = vrot.slane %v1349, 2
        %v1472 = vsel %vm748, %v1470, %v1471
        %v1473 = vrot.slane %v1350, 2
        %v1474 = vsel %vm748, %v1471, %v1473
        %v1475 = vrot.slane %v1351, 2
        %v1476 = vrot.slane %v1352, 2
        %v1477 = vsel %vm748, %v1475, %v1476
        %v1478 = vrot.slane %v1353, 2
        %v1479 = vsel %vm748, %v1476, %v1478
        %v1480 = vrot.slane %v1354, 2
        %v1481 = vrot.slane %v1355, 2
        %v1482 = vsel %vm748, %v1480, %v1481
        %v1483 = vrot.slane %v1356, 2
        %v1484 = vsel %vm748, %v1481, %v1483
        %v1517 = vadd.f32 %v1272, %v1407
        %v1518 = vadd.f32 %v1273, %v1409
        %v1519 = vadd.f32 %v1274, %v1412
        %v1520 = vadd.f32 %v1275, %v1414
        %v1521 = vadd.f32 %v1276, %v1417
        %v1522 = vadd.f32 %v1277, %v1419
        %v1523 = vadd.f32 %v1278, %v1422
        %v1524 = vadd.f32 %v1279, %v1424
        %v1525 = vadd.f32 %v1280, %v1427
        %v1526 = vadd.f32 %v1281, %v1429
        %v1527 = vadd.f32 %v1282, %v1432
        %v1528 = vadd.f32 %v1283, %v1434
        %v1529 = vadd.f32 %v1284, %v1437
        %v1530 = vadd.f32 %v1285, %v1439
        %v1531 = vadd.f32 %v1286, %v1442
        %v1532 = vadd.f32 %v1287, %v1444
        %v1533 = vadd.f32 %v1288, %v1447
        %v1534 = vadd.f32 %v1289, %v1449
        %v1535 = vadd.f32 %v1290, %v1452
        %v1536 = vadd.f32 %v1291, %v1454
        %v1537 = vadd.f32 %v1292, %v1457
        %v1538 = vadd.f32 %v1293, %v1459
        %v1539 = vadd.f32 %v1294, %v1462
        %v1540 = vadd.f32 %v1295, %v1464
        %v1541 = vadd.f32 %v1296, %v1467
        %v1542 = vadd.f32 %v1297, %v1469
        %v1543 = vadd.f32 %v1298, %v1472
        %v1544 = vadd.f32 %v1299, %v1474
        %v1545 = vadd.f32 %v1300, %v1477
        %v1546 = vadd.f32 %v1301, %v1479
        %v1547 = vadd.f32 %v1302, %v1482
        %v1548 = vadd.f32 %v1303, %v1484
        %s1549 = scalar_lea.vmem %s233, 24 [#allocation2]
        %v1550 = vld [vmem:[%s1549] sm:$0xf]
        %v1551 = vld [vmem:[%s1549 + $0x4] sm:$0xf]
        %v1552 = vld [vmem:[%s1549 + $0x8] sm:$0xf]
        %v1553 = vld [vmem:[%s1549 + $0xc] sm:$0xf]
        %v1554 = vld [vmem:[%s1549 + $0x10] sm:$0xf]
        %v1555 = vld [vmem:[%s1549 + $0x14] sm:$0xf]
        %v1556 = vld [vmem:[%s1549 + $0x18] sm:$0xf]
        %v1557 = vld [vmem:[%s1549 + $0x1c] sm:$0xf]
        %v1558 = vld [vmem:[%s1549 + $0x20] sm:$0xf]
        %v1559 = vld [vmem:[%s1549 + $0x24] sm:$0xf]
        %v1560 = vld [vmem:[%s1549 + $0x28] sm:$0xf]
        %v1561 = vld [vmem:[%s1549 + $0x2c] sm:$0xf]
        %v1562 = vld [vmem:[%s1549 + $0x30] sm:$0xf]
        %v1563 = vld [vmem:[%s1549 + $0x34] sm:$0xf]
        %v1564 = vld [vmem:[%s1549 + $0x38] sm:$0xf]
        %v1565 = vld [vmem:[%s1549 + $0x3c] sm:$0xf]
        %v1566 = vld [vmem:[%s1549 + $0x40] sm:$0xf]
        %v1567 = vld [vmem:[%s1549 + $0x44] sm:$0xf]
        %v1568 = vld [vmem:[%s1549 + $0x48] sm:$0xf]
        %v1569 = vld [vmem:[%s1549 + $0x4c] sm:$0xf]
        %v1570 = vld [vmem:[%s1549 + $0x50] sm:$0xf]
        %v1571 = vld [vmem:[%s1549 + $0x54] sm:$0xf]
        %v1572 = vld [vmem:[%s1549 + $0x58] sm:$0xf]
        %v1573 = vld [vmem:[%s1549 + $0x5c] sm:$0xf]
        %v1574 = vld [vmem:[%s1549 + $0x60] sm:$0xf]
        %v1575 = vld [vmem:[%s1549 + $0x64] sm:$0xf]
        %v1576 = vld [vmem:[%s1549 + $0x68] sm:$0xf]
        %v1577 = vld [vmem:[%s1549 + $0x6c] sm:$0xf]
        %v1578 = vld [vmem:[%s1549 + $0x70] sm:$0xf]
        %v1579 = vld [vmem:[%s1549 + $0x74] sm:$0xf]
        %v1580 = vld [vmem:[%s1549 + $0x78] sm:$0xf]
        %v1581 = vld [vmem:[%s1549 + $0x7c] sm:$0xf]
        %v1582 = vld [vmem:[%s1549 + $0x80] sm:$0xf]
        %v1583 = vld [vmem:[%s1549 + $0x84] sm:$0xf]
        %v1584 = vld [vmem:[%s1549 + $0x88] sm:$0xf]
        %v1585 = vld [vmem:[%s1549 + $0x8c] sm:$0xf]
        %v1586 = vld [vmem:[%s1549 + $0x90] sm:$0xf]
        %v1587 = vld [vmem:[%s1549 + $0x94] sm:$0xf]
        %v1588 = vld [vmem:[%s1549 + $0x98] sm:$0xf]
        %v1589 = vld [vmem:[%s1549 + $0x9c] sm:$0xf]
        %v1590 = vld [vmem:[%s1549 + $0xa0] sm:$0xf]
        %v1591 = vld [vmem:[%s1549 + $0xa4] sm:$0xf]
        %v1592 = vld [vmem:[%s1549 + $0xa8] sm:$0xf]
        %v1593 = vld [vmem:[%s1549 + $0xac] sm:$0xf]
        %v1594 = vld [vmem:[%s1549 + $0xb0] sm:$0xf]
        %v1595 = vld [vmem:[%s1549 + $0xb4] sm:$0xf]
        %v1596 = vld [vmem:[%s1549 + $0xb8] sm:$0xf]
        %v1597 = vld [vmem:[%s1549 + $0xbc] sm:$0xf]
        %v1598 = vunpack.c.l.bf16 %v1550
        %v1599 = vunpack.c.l.bf16 %v1551
        %v1600 = vunpack.c.l.bf16 %v1552
        %v1601 = vunpack.c.l.bf16 %v1553
        %v1602 = vunpack.c.l.bf16 %v1554
        %v1603 = vunpack.c.l.bf16 %v1555
        %v1604 = vunpack.c.l.bf16 %v1556
        %v1605 = vunpack.c.l.bf16 %v1557
        %v1606 = vunpack.c.l.bf16 %v1558
        %v1607 = vunpack.c.l.bf16 %v1559
        %v1608 = vunpack.c.l.bf16 %v1560
        %v1609 = vunpack.c.l.bf16 %v1561
        %v1610 = vunpack.c.l.bf16 %v1562
        %v1611 = vunpack.c.l.bf16 %v1563
        %v1612 = vunpack.c.l.bf16 %v1564
        %v1613 = vunpack.c.l.bf16 %v1565
        %v1614 = vunpack.c.l.bf16 %v1566
        %v1615 = vunpack.c.l.bf16 %v1567
        %v1616 = vunpack.c.l.bf16 %v1568
        %v1617 = vunpack.c.l.bf16 %v1569
        %v1618 = vunpack.c.l.bf16 %v1570
        %v1619 = vunpack.c.l.bf16 %v1571
        %v1620 = vunpack.c.l.bf16 %v1572
        %v1621 = vunpack.c.l.bf16 %v1573
        %v1622 = vunpack.c.l.bf16 %v1574
        %v1623 = vunpack.c.l.bf16 %v1575
        %v1624 = vunpack.c.l.bf16 %v1576
        %v1625 = vunpack.c.l.bf16 %v1577
        %v1626 = vunpack.c.l.bf16 %v1578
        %v1627 = vunpack.c.l.bf16 %v1579
        %v1628 = vunpack.c.l.bf16 %v1580
        %v1629 = vunpack.c.l.bf16 %v1581
        %v1630 = vunpack.c.l.bf16 %v1582
        %v1631 = vunpack.c.l.bf16 %v1583
        %v1632 = vunpack.c.l.bf16 %v1584
        %v1633 = vunpack.c.l.bf16 %v1585
        %v1634 = vunpack.c.l.bf16 %v1586
        %v1635 = vunpack.c.l.bf16 %v1587
        %v1636 = vunpack.c.l.bf16 %v1588
        %v1637 = vunpack.c.l.bf16 %v1589
        %v1638 = vunpack.c.l.bf16 %v1590
        %v1639 = vunpack.c.l.bf16 %v1591
        %v1640 = vunpack.c.l.bf16 %v1592
        %v1641 = vunpack.c.l.bf16 %v1593
        %v1642 = vunpack.c.l.bf16 %v1594
        %v1643 = vunpack.c.l.bf16 %v1595
        %v1644 = vunpack.c.l.bf16 %v1596
        %v1645 = vunpack.c.l.bf16 %v1597
        %v1646 = vld [vmem:[#allocation5 + $0x6] sm:$0x1]
        %v1647 = vlaneseq
        %v1648 = vshrl.u32 %v1647, 7
        %v1649 = vsub.s32 0, %v1648
        %v1650 = vrot.slane %v1646, %v1649
        %v1651 = vmul.f32 %v1598, %v1650
        %v1652 = vmul.f32 %v1599, %v1650
        %v1653 = vmul.f32 %v1601, %v1650
        %v1654 = vmul.f32 %v1602, %v1650
        %v1655 = vmul.f32 %v1604, %v1650
        %v1656 = vmul.f32 %v1605, %v1650
        %v1657 = vmul.f32 %v1607, %v1650
        %v1658 = vmul.f32 %v1608, %v1650
        %v1659 = vmul.f32 %v1610, %v1650
        %v1660 = vmul.f32 %v1611, %v1650
        %v1661 = vmul.f32 %v1613, %v1650
        %v1662 = vmul.f32 %v1614, %v1650
        %v1663 = vmul.f32 %v1616, %v1650
        %v1664 = vmul.f32 %v1617, %v1650
        %v1665 = vmul.f32 %v1619, %v1650
        %v1666 = vmul.f32 %v1620, %v1650
        %v1667 = vmul.f32 %v1622, %v1650
        %v1668 = vmul.f32 %v1623, %v1650
        %v1669 = vmul.f32 %v1625, %v1650
        %v1670 = vmul.f32 %v1626, %v1650
        %v1671 = vmul.f32 %v1628, %v1650
        %v1672 = vmul.f32 %v1629, %v1650
        %v1673 = vmul.f32 %v1631, %v1650
        %v1674 = vmul.f32 %v1632, %v1650
        %v1675 = vmul.f32 %v1634, %v1650
        %v1676 = vmul.f32 %v1635, %v1650
        %v1677 = vmul.f32 %v1637, %v1650
        %v1678 = vmul.f32 %v1638, %v1650
        %v1679 = vmul.f32 %v1640, %v1650
        %v1680 = vmul.f32 %v1641, %v1650
        %v1681 = vmul.f32 %v1643, %v1650
        %v1682 = vmul.f32 %v1644, %v1650
        %v1683 = vadd.f32 %v1517, %v1651
        %v1684 = vadd.f32 %v1518, %v1652
        %v1685 = vadd.f32 %v1519, %v1653
        %v1686 = vadd.f32 %v1520, %v1654
        %v1687 = vadd.f32 %v1521, %v1655
        %v1688 = vadd.f32 %v1522, %v1656
        %v1689 = vadd.f32 %v1523, %v1657
        %v1690 = vadd.f32 %v1524, %v1658
        %v1691 = vadd.f32 %v1525, %v1659
        %v1692 = vadd.f32 %v1526, %v1660
        %v1693 = vadd.f32 %v1527, %v1661
        %v1694 = vadd.f32 %v1528, %v1662
        %v1695 = vadd.f32 %v1529, %v1663
        %v1696 = vadd.f32 %v1530, %v1664
        %v1697 = vadd.f32 %v1531, %v1665
        %v1698 = vadd.f32 %v1532, %v1666
        %v1699 = vadd.f32 %v1533, %v1667
        %v1700 = vadd.f32 %v1534, %v1668
        %v1701 = vadd.f32 %v1535, %v1669
        %v1702 = vadd.f32 %v1536, %v1670
        %v1703 = vadd.f32 %v1537, %v1671
        %v1704 = vadd.f32 %v1538, %v1672
        %v1705 = vadd.f32 %v1539, %v1673
        %v1706 = vadd.f32 %v1540, %v1674
        %v1707 = vadd.f32 %v1541, %v1675
        %v1708 = vadd.f32 %v1542, %v1676
        %v1709 = vadd.f32 %v1543, %v1677
        %v1710 = vadd.f32 %v1544, %v1678
        %v1711 = vadd.f32 %v1545, %v1679
        %v1712 = vadd.f32 %v1546, %v1680
        %v1713 = vadd.f32 %v1547, %v1681
        %v1714 = vadd.f32 %v1548, %v1682
        %v1715 = vld [vmem:[#allocation5 + $0x7] sm:$0x1]
        %v1716 = vlaneseq
        %v1717 = vshrl.u32 %v1716, 7
        %v1718 = vsub.s32 0, %v1717
        %v1719 = vrot.slane %v1715, %v1718
        %v1720 = vmul.f32 %v1598, %v1719
        %v1721 = vmul.f32 %v1599, %v1719
        %v1722 = vmul.f32 %v1600, %v1719
        %v1723 = vmul.f32 %v1601, %v1719
        %v1724 = vmul.f32 %v1602, %v1719
        %v1725 = vmul.f32 %v1603, %v1719
        %v1726 = vmul.f32 %v1604, %v1719
        %v1727 = vmul.f32 %v1605, %v1719
        %v1728 = vmul.f32 %v1606, %v1719
        %v1729 = vmul.f32 %v1607, %v1719
        %v1730 = vmul.f32 %v1608, %v1719
        %v1731 = vmul.f32 %v1609, %v1719
        %v1732 = vmul.f32 %v1610, %v1719
        %v1733 = vmul.f32 %v1611, %v1719
        %v1734 = vmul.f32 %v1612, %v1719
        %v1735 = vmul.f32 %v1613, %v1719
        %v1736 = vmul.f32 %v1614, %v1719
        %v1737 = vmul.f32 %v1615, %v1719
        %v1738 = vmul.f32 %v1616, %v1719
        %v1739 = vmul.f32 %v1617, %v1719
        %v1740 = vmul.f32 %v1618, %v1719
        %v1741 = vmul.f32 %v1619, %v1719
        %v1742 = vmul.f32 %v1620, %v1719
        %v1743 = vmul.f32 %v1621, %v1719
        %v1744 = vmul.f32 %v1622, %v1719
        %v1745 = vmul.f32 %v1623, %v1719
        %v1746 = vmul.f32 %v1624, %v1719
        %v1747 = vmul.f32 %v1625, %v1719
        %v1748 = vmul.f32 %v1626, %v1719
        %v1749 = vmul.f32 %v1627, %v1719
        %v1750 = vmul.f32 %v1628, %v1719
        %v1751 = vmul.f32 %v1629, %v1719
        %v1752 = vmul.f32 %v1630, %v1719
        %v1753 = vmul.f32 %v1631, %v1719
        %v1754 = vmul.f32 %v1632, %v1719
        %v1755 = vmul.f32 %v1633, %v1719
        %v1756 = vmul.f32 %v1634, %v1719
        %v1757 = vmul.f32 %v1635, %v1719
        %v1758 = vmul.f32 %v1636, %v1719
        %v1759 = vmul.f32 %v1637, %v1719
        %v1760 = vmul.f32 %v1638, %v1719
        %v1761 = vmul.f32 %v1639, %v1719
        %v1762 = vmul.f32 %v1640, %v1719
        %v1763 = vmul.f32 %v1641, %v1719
        %v1764 = vmul.f32 %v1642, %v1719
        %v1765 = vmul.f32 %v1643, %v1719
        %v1766 = vmul.f32 %v1644, %v1719
        %v1767 = vmul.f32 %v1645, %v1719
        %v1816 = vrot.slane %v1720, 1
        %v1817 = vrot.slane %v1721, 1
        %v1818 = vsel %vm502, %v1816, %v1817
        %v1819 = vrot.slane %v1722, 1
        %v1820 = vsel %vm502, %v1817, %v1819
        %v1821 = vrot.slane %v1723, 1
        %v1822 = vrot.slane %v1724, 1
        %v1823 = vsel %vm502, %v1821, %v1822
        %v1824 = vrot.slane %v1725, 1
        %v1825 = vsel %vm502, %v1822, %v1824
        %v1826 = vrot.slane %v1726, 1
        %v1827 = vrot.slane %v1727, 1
        %v1828 = vsel %vm502, %v1826, %v1827
        %v1829 = vrot.slane %v1728, 1
        %v1830 = vsel %vm502, %v1827, %v1829
        %v1831 = vrot.slane %v1729, 1
        %v1832 = vrot.slane %v1730, 1
        %v1833 = vsel %vm502, %v1831, %v1832
        %v1834 = vrot.slane %v1731, 1
        %v1835 = vsel %vm502, %v1832, %v1834
        %v1836 = vrot.slane %v1732, 1
        %v1837 = vrot.slane %v1733, 1
        %v1838 = vsel %vm502, %v1836, %v1837
        %v1839 = vrot.slane %v1734, 1
        %v1840 = vsel %vm502, %v1837, %v1839
        %v1841 = vrot.slane %v1735, 1
        %v1842 = vrot.slane %v1736, 1
        %v1843 = vsel %vm502, %v1841, %v1842
        %v1844 = vrot.slane %v1737, 1
        %v1845 = vsel %vm502, %v1842, %v1844
        %v1846 = vrot.slane %v1738, 1
        %v1847 = vrot.slane %v1739, 1
        %v1848 = vsel %vm502, %v1846, %v1847
        %v1849 = vrot.slane %v1740, 1
        %v1850 = vsel %vm502, %v1847, %v1849
        %v1851 = vrot.slane %v1741, 1
        %v1852 = vrot.slane %v1742, 1
        %v1853 = vsel %vm502, %v1851, %v1852
        %v1854 = vrot.slane %v1743, 1
        %v1855 = vsel %vm502, %v1852, %v1854
        %v1856 = vrot.slane %v1744, 1
        %v1857 = vrot.slane %v1745, 1
        %v1858 = vsel %vm502, %v1856, %v1857
        %v1859 = vrot.slane %v1746, 1
        %v1860 = vsel %vm502, %v1857, %v1859
        %v1861 = vrot.slane %v1747, 1
        %v1862 = vrot.slane %v1748, 1
        %v1863 = vsel %vm502, %v1861, %v1862
        %v1864 = vrot.slane %v1749, 1
        %v1865 = vsel %vm502, %v1862, %v1864
        %v1866 = vrot.slane %v1750, 1
        %v1867 = vrot.slane %v1751, 1
        %v1868 = vsel %vm502, %v1866, %v1867
        %v1869 = vrot.slane %v1752, 1
        %v1870 = vsel %vm502, %v1867, %v1869
        %v1871 = vrot.slane %v1753, 1
        %v1872 = vrot.slane %v1754, 1
        %v1873 = vsel %vm502, %v1871, %v1872
        %v1874 = vrot.slane %v1755, 1
        %v1875 = vsel %vm502, %v1872, %v1874
        %v1876 = vrot.slane %v1756, 1
        %v1877 = vrot.slane %v1757, 1
        %v1878 = vsel %vm502, %v1876, %v1877
        %v1879 = vrot.slane %v1758, 1
        %v1880 = vsel %vm502, %v1877, %v1879
        %v1881 = vrot.slane %v1759, 1
        %v1882 = vrot.slane %v1760, 1
        %v1883 = vsel %vm502, %v1881, %v1882
        %v1884 = vrot.slane %v1761, 1
        %v1885 = vsel %vm502, %v1882, %v1884
        %v1886 = vrot.slane %v1762, 1
        %v1887 = vrot.slane %v1763, 1
        %v1888 = vsel %vm502, %v1886, %v1887
        %v1889 = vrot.slane %v1764, 1
        %v1890 = vsel %vm502, %v1887, %v1889
        %v1891 = vrot.slane %v1765, 1
        %v1892 = vrot.slane %v1766, 1
        %v1893 = vsel %vm502, %v1891, %v1892
        %v1894 = vrot.slane %v1767, 1
        %v1895 = vsel %vm502, %v1892, %v1894
        %v1928 = vadd.f32 %v1683, %v1818
        %v1929 = vadd.f32 %v1684, %v1820
        %v1930 = vadd.f32 %v1685, %v1823
        %v1931 = vadd.f32 %v1686, %v1825
        %v1932 = vadd.f32 %v1687, %v1828
        %v1933 = vadd.f32 %v1688, %v1830
        %v1934 = vadd.f32 %v1689, %v1833
        %v1935 = vadd.f32 %v1690, %v1835
        %v1936 = vadd.f32 %v1691, %v1838
        %v1937 = vadd.f32 %v1692, %v1840
        %v1938 = vadd.f32 %v1693, %v1843
        %v1939 = vadd.f32 %v1694, %v1845
        %v1940 = vadd.f32 %v1695, %v1848
        %v1941 = vadd.f32 %v1696, %v1850
        %v1942 = vadd.f32 %v1697, %v1853
        %v1943 = vadd.f32 %v1698, %v1855
        %v1944 = vadd.f32 %v1699, %v1858
        %v1945 = vadd.f32 %v1700, %v1860
        %v1946 = vadd.f32 %v1701, %v1863
        %v1947 = vadd.f32 %v1702, %v1865
        %v1948 = vadd.f32 %v1703, %v1868
        %v1949 = vadd.f32 %v1704, %v1870
        %v1950 = vadd.f32 %v1705, %v1873
        %v1951 = vadd.f32 %v1706, %v1875
        %v1952 = vadd.f32 %v1707, %v1878
        %v1953 = vadd.f32 %v1708, %v1880
        %v1954 = vadd.f32 %v1709, %v1883
        %v1955 = vadd.f32 %v1710, %v1885
        %v1956 = vadd.f32 %v1711, %v1888
        %v1957 = vadd.f32 %v1712, %v1890
        %v1958 = vadd.f32 %v1713, %v1893
        %v1959 = vadd.f32 %v1714, %v1895
        %v1960 = vld [vmem:[#allocation5 + $0x8] sm:$0x1]
        %v1961 = vlaneseq
        %v1962 = vshrl.u32 %v1961, 7
        %v1963 = vsub.s32 0, %v1962
        %v1964 = vrot.slane %v1960, %v1963
        %v1965 = vmul.f32 %v1598, %v1964
        %v1966 = vmul.f32 %v1599, %v1964
        %v1967 = vmul.f32 %v1600, %v1964
        %v1968 = vmul.f32 %v1601, %v1964
        %v1969 = vmul.f32 %v1602, %v1964
        %v1970 = vmul.f32 %v1603, %v1964
        %v1971 = vmul.f32 %v1604, %v1964
        %v1972 = vmul.f32 %v1605, %v1964
        %v1973 = vmul.f32 %v1606, %v1964
        %v1974 = vmul.f32 %v1607, %v1964
        %v1975 = vmul.f32 %v1608, %v1964
        %v1976 = vmul.f32 %v1609, %v1964
        %v1977 = vmul.f32 %v1610, %v1964
        %v1978 = vmul.f32 %v1611, %v1964
        %v1979 = vmul.f32 %v1612, %v1964
        %v1980 = vmul.f32 %v1613, %v1964
        %v1981 = vmul.f32 %v1614, %v1964
        %v1982 = vmul.f32 %v1615, %v1964
        %v1983 = vmul.f32 %v1616, %v1964
        %v1984 = vmul.f32 %v1617, %v1964
        %v1985 = vmul.f32 %v1618, %v1964
        %v1986 = vmul.f32 %v1619, %v1964
        %v1987 = vmul.f32 %v1620, %v1964
        %v1988 = vmul.f32 %v1621, %v1964
        %v1989 = vmul.f32 %v1622, %v1964
        %v1990 = vmul.f32 %v1623, %v1964
        %v1991 = vmul.f32 %v1624, %v1964
        %v1992 = vmul.f32 %v1625, %v1964
        %v1993 = vmul.f32 %v1626, %v1964
        %v1994 = vmul.f32 %v1627, %v1964
        %v1995 = vmul.f32 %v1628, %v1964
        %v1996 = vmul.f32 %v1629, %v1964
        %v1997 = vmul.f32 %v1630, %v1964
        %v1998 = vmul.f32 %v1631, %v1964
        %v1999 = vmul.f32 %v1632, %v1964
        %v2000 = vmul.f32 %v1633, %v1964
        %v2001 = vmul.f32 %v1634, %v1964
        %v2002 = vmul.f32 %v1635, %v1964
        %v2003 = vmul.f32 %v1636, %v1964
        %v2004 = vmul.f32 %v1637, %v1964
        %v2005 = vmul.f32 %v1638, %v1964
        %v2006 = vmul.f32 %v1639, %v1964
        %v2007 = vmul.f32 %v1640, %v1964
        %v2008 = vmul.f32 %v1641, %v1964
        %v2009 = vmul.f32 %v1642, %v1964
        %v2010 = vmul.f32 %v1643, %v1964
        %v2011 = vmul.f32 %v1644, %v1964
        %v2012 = vmul.f32 %v1645, %v1964
        %v2061 = vrot.slane %v1965, 2
        %v2062 = vrot.slane %v1966, 2
        %v2063 = vsel %vm748, %v2061, %v2062
        %v2064 = vrot.slane %v1967, 2
        %v2065 = vsel %vm748, %v2062, %v2064
        %v2066 = vrot.slane %v1968, 2
        %v2067 = vrot.slane %v1969, 2
        %v2068 = vsel %vm748, %v2066, %v2067
        %v2069 = vrot.slane %v1970, 2
        %v2070 = vsel %vm748, %v2067, %v2069
        %v2071 = vrot.slane %v1971, 2
        %v2072 = vrot.slane %v1972, 2
        %v2073 = vsel %vm748, %v2071, %v2072
        %v2074 = vrot.slane %v1973, 2
        %v2075 = vsel %vm748, %v2072, %v2074
        %v2076 = vrot.slane %v1974, 2
        %v2077 = vrot.slane %v1975, 2
        %v2078 = vsel %vm748, %v2076, %v2077
        %v2079 = vrot.slane %v1976, 2
        %v2080 = vsel %vm748, %v2077, %v2079
        %v2081 = vrot.slane %v1977, 2
        %v2082 = vrot.slane %v1978, 2
        %v2083 = vsel %vm748, %v2081, %v2082
        %v2084 = vrot.slane %v1979, 2
        %v2085 = vsel %vm748, %v2082, %v2084
        %v2086 = vrot.slane %v1980, 2
        %v2087 = vrot.slane %v1981, 2
        %v2088 = vsel %vm748, %v2086, %v2087
        %v2089 = vrot.slane %v1982, 2
        %v2090 = vsel %vm748, %v2087, %v2089
        %v2091 = vrot.slane %v1983, 2
        %v2092 = vrot.slane %v1984, 2
        %v2093 = vsel %vm748, %v2091, %v2092
        %v2094 = vrot.slane %v1985, 2
        %v2095 = vsel %vm748, %v2092, %v2094
        %v2096 = vrot.slane %v1986, 2
        %v2097 = vrot.slane %v1987, 2
        %v2098 = vsel %vm748, %v2096, %v2097
        %v2099 = vrot.slane %v1988, 2
        %v2100 = vsel %vm748, %v2097, %v2099
        %v2101 = vrot.slane %v1989, 2
        %v2102 = vrot.slane %v1990, 2
        %v2103 = vsel %vm748, %v2101, %v2102
        %v2104 = vrot.slane %v1991, 2
        %v2105 = vsel %vm748, %v2102, %v2104
        %v2106 = vrot.slane %v1992, 2
        %v2107 = vrot.slane %v1993, 2
        %v2108 = vsel %vm748, %v2106, %v2107
        %v2109 = vrot.slane %v1994, 2
        %v2110 = vsel %vm748, %v2107, %v2109
        %v2111 = vrot.slane %v1995, 2
        %v2112 = vrot.slane %v1996, 2
        %v2113 = vsel %vm748, %v2111, %v2112
        %v2114 = vrot.slane %v1997, 2
        %v2115 = vsel %vm748, %v2112, %v2114
        %v2116 = vrot.slane %v1998, 2
        %v2117 = vrot.slane %v1999, 2
        %v2118 = vsel %vm748, %v2116, %v2117
        %v2119 = vrot.slane %v2000, 2
        %v2120 = vsel %vm748, %v2117, %v2119
        %v2121 = vrot.slane %v2001, 2
        %v2122 = vrot.slane %v2002, 2
        %v2123 = vsel %vm748, %v2121, %v2122
        %v2124 = vrot.slane %v2003, 2
        %v2125 = vsel %vm748, %v2122, %v2124
        %v2126 = vrot.slane %v2004, 2
        %v2127 = vrot.slane %v2005, 2
        %v2128 = vsel %vm748, %v2126, %v2127
        %v2129 = vrot.slane %v2006, 2
        %v2130 = vsel %vm748, %v2127, %v2129
        %v2131 = vrot.slane %v2007, 2
        %v2132 = vrot.slane %v2008, 2
        %v2133 = vsel %vm748, %v2131, %v2132
        %v2134 = vrot.slane %v2009, 2
        %v2135 = vsel %vm748, %v2132, %v2134
        %v2136 = vrot.slane %v2010, 2
        %v2137 = vrot.slane %v2011, 2
        %v2138 = vsel %vm748, %v2136, %v2137
        %v2139 = vrot.slane %v2012, 2
        %v2140 = vsel %vm748, %v2137, %v2139
        %v2173 = vadd.f32 %v1928, %v2063
        %v2174 = vadd.f32 %v1929, %v2065
        %v2175 = vadd.f32 %v1930, %v2068
        %v2176 = vadd.f32 %v1931, %v2070
        %v2177 = vadd.f32 %v1932, %v2073
        %v2178 = vadd.f32 %v1933, %v2075
        %v2179 = vadd.f32 %v1934, %v2078
        %v2180 = vadd.f32 %v1935, %v2080
        %v2181 = vadd.f32 %v1936, %v2083
        %v2182 = vadd.f32 %v1937, %v2085
        %v2183 = vadd.f32 %v1938, %v2088
        %v2184 = vadd.f32 %v1939, %v2090
        %v2185 = vadd.f32 %v1940, %v2093
        %v2186 = vadd.f32 %v1941, %v2095
        %v2187 = vadd.f32 %v1942, %v2098
        %v2188 = vadd.f32 %v1943, %v2100
        %v2189 = vadd.f32 %v1944, %v2103
        %v2190 = vadd.f32 %v1945, %v2105
        %v2191 = vadd.f32 %v1946, %v2108
        %v2192 = vadd.f32 %v1947, %v2110
        %v2193 = vadd.f32 %v1948, %v2113
        %v2194 = vadd.f32 %v1949, %v2115
        %v2195 = vadd.f32 %v1950, %v2118
        %v2196 = vadd.f32 %v1951, %v2120
        %v2197 = vadd.f32 %v1952, %v2123
        %v2198 = vadd.f32 %v1953, %v2125
        %v2199 = vadd.f32 %v1954, %v2128
        %v2200 = vadd.f32 %v1955, %v2130
        %v2201 = vadd.f32 %v1956, %v2133
        %v2202 = vadd.f32 %v1957, %v2135
        %v2203 = vadd.f32 %v1958, %v2138
        %v2204 = vadd.f32 %v1959, %v2140
        %v2205 = vld [vmem:[%s2] sm:$0x1]
        %v2207 = vlaneseq
        %v2208 = vshrl.u32 %v2207, 7
        %v2209 = vsub.s32 0, %v2208
        %v2210 = vrot.slane %v2205, %v2209
        %v2212 = vadd.f32 %v2173, %v2210
        %v2213 = vadd.f32 %v2174, %v2210
        %v2214 = vadd.f32 %v2175, %v2210
        %v2215 = vadd.f32 %v2176, %v2210
        %v2216 = vadd.f32 %v2177, %v2210
        %v2217 = vadd.f32 %v2178, %v2210
        %v2218 = vadd.f32 %v2179, %v2210
        %v2219 = vadd.f32 %v2180, %v2210
        %v2220 = vadd.f32 %v2181, %v2210
        %v2221 = vadd.f32 %v2182, %v2210
        %v2222 = vadd.f32 %v2183, %v2210
        %v2223 = vadd.f32 %v2184, %v2210
        %v2224 = vadd.f32 %v2185, %v2210
        %v2225 = vadd.f32 %v2186, %v2210
        %v2226 = vadd.f32 %v2187, %v2210
        %v2227 = vadd.f32 %v2188, %v2210
        %v2228 = vadd.f32 %v2189, %v2210
        %v2229 = vadd.f32 %v2190, %v2210
        %v2230 = vadd.f32 %v2191, %v2210
        %v2231 = vadd.f32 %v2192, %v2210
        %v2232 = vadd.f32 %v2193, %v2210
        %v2233 = vadd.f32 %v2194, %v2210
        %v2234 = vadd.f32 %v2195, %v2210
        %v2235 = vadd.f32 %v2196, %v2210
        %v2236 = vadd.f32 %v2197, %v2210
        %v2237 = vadd.f32 %v2198, %v2210
        %v2238 = vadd.f32 %v2199, %v2210
        %v2239 = vadd.f32 %v2200, %v2210
        %v2240 = vadd.f32 %v2201, %v2210
        %v2241 = vadd.f32 %v2202, %v2210
        %v2242 = vadd.f32 %v2203, %v2210
        %v2243 = vadd.f32 %v2204, %v2210
        %v2244 = vmax.f32 %v2212, 0.0
        %v2245 = vmax.f32 %v2213, 0.0
        %v2246 = vmax.f32 %v2214, 0.0
        %v2247 = vmax.f32 %v2215, 0.0
        %v2248 = vmax.f32 %v2216, 0.0
        %v2249 = vmax.f32 %v2217, 0.0
        %v2250 = vmax.f32 %v2218, 0.0
        %v2251 = vmax.f32 %v2219, 0.0
        %v2252 = vmax.f32 %v2220, 0.0
        %v2253 = vmax.f32 %v2221, 0.0
        %v2254 = vmax.f32 %v2222, 0.0
        %v2255 = vmax.f32 %v2223, 0.0
        %v2256 = vmax.f32 %v2224, 0.0
        %v2257 = vmax.f32 %v2225, 0.0
        %v2258 = vmax.f32 %v2226, 0.0
        %v2259 = vmax.f32 %v2227, 0.0
        %v2260 = vmax.f32 %v2228, 0.0
        %v2261 = vmax.f32 %v2229, 0.0
        %v2262 = vmax.f32 %v2230, 0.0
        %v2263 = vmax.f32 %v2231, 0.0
        %v2264 = vmax.f32 %v2232, 0.0
        %v2265 = vmax.f32 %v2233, 0.0
        %v2266 = vmax.f32 %v2234, 0.0
        %v2267 = vmax.f32 %v2235, 0.0
        %v2268 = vmax.f32 %v2236, 0.0
        %v2269 = vmax.f32 %v2237, 0.0
        %v2270 = vmax.f32 %v2238, 0.0
        %v2271 = vmax.f32 %v2239, 0.0
        %v2272 = vmax.f32 %v2240, 0.0
        %v2273 = vmax.f32 %v2241, 0.0
        %v2274 = vmax.f32 %v2242, 0.0
        %v2275 = vmax.f32 %v2243, 0.0
        %v2276 = vpack.c.bf16 %v2245, %v2244
        %v2277 = vpack.c.bf16 %v2247, %v2246
        %v2278 = vpack.c.bf16 %v2249, %v2248
        %v2279 = vpack.c.bf16 %v2251, %v2250
        %v2280 = vpack.c.bf16 %v2253, %v2252
        %v2281 = vpack.c.bf16 %v2255, %v2254
        %v2282 = vpack.c.bf16 %v2257, %v2256
        %v2283 = vpack.c.bf16 %v2259, %v2258
        %v2284 = vpack.c.bf16 %v2261, %v2260
        %v2285 = vpack.c.bf16 %v2263, %v2262
        %v2286 = vpack.c.bf16 %v2265, %v2264
        %v2287 = vpack.c.bf16 %v2267, %v2266
        %v2288 = vpack.c.bf16 %v2269, %v2268
        %v2289 = vpack.c.bf16 %v2271, %v2270
        %v2290 = vpack.c.bf16 %v2273, %v2272
        %v2291 = vpack.c.bf16 %v2275, %v2274
        %v2292 = vld [vmem:[#allocation7] sm:$0xf]
        %v2293 = vld [vmem:[#allocation7 + $0x4] sm:$0xf]
        %v2294 = vld [vmem:[#allocation7 + $0x8] sm:$0xf]
        %v2295 = vld [vmem:[#allocation7 + $0xc] sm:$0xf]
        %v2296 = vld [vmem:[#allocation7 + $0x10] sm:$0xf]
        %v2297 = vld [vmem:[#allocation7 + $0x14] sm:$0xf]
        %v2298 = vld [vmem:[#allocation7 + $0x18] sm:$0xf]
        %v2299 = vld [vmem:[#allocation7 + $0x1c] sm:$0xf]
        %v2300 = vld [vmem:[#allocation7 + $0x20] sm:$0xf]
        %v2301 = vld [vmem:[#allocation7 + $0x24] sm:$0xf]
        %v2302 = vld [vmem:[#allocation7 + $0x28] sm:$0xf]
        %v2303 = vld [vmem:[#allocation7 + $0x2c] sm:$0xf]
        %v2304 = vld [vmem:[#allocation7 + $0x30] sm:$0xf]
        %v2305 = vld [vmem:[#allocation7 + $0x34] sm:$0xf]
        %v2306 = vld [vmem:[#allocation7 + $0x38] sm:$0xf]
        %v2307 = vld [vmem:[#allocation7 + $0x3c] sm:$0xf]
        %v2324 = vunpack.c.l.b16 %v2292
        %v2325 = vunpack.c.l.b16 %v2293
        %v2326 = vunpack.c.l.b16 %v2294
        %v2327 = vunpack.c.l.b16 %v2295
        %v2328 = vunpack.c.l.b16 %v2296
        %v2329 = vunpack.c.l.b16 %v2297
        %v2330 = vunpack.c.l.b16 %v2298
        %v2331 = vunpack.c.l.b16 %v2299
        %v2332 = vunpack.c.l.b16 %v2300
        %v2333 = vunpack.c.l.b16 %v2301
        %v2334 = vunpack.c.l.b16 %v2302
        %v2335 = vunpack.c.l.b16 %v2303
        %v2336 = vunpack.c.l.b16 %v2304
        %v2337 = vunpack.c.l.b16 %v2305
        %v2338 = vunpack.c.l.b16 %v2306
        %v2339 = vunpack.c.l.b16 %v2307
        %v2340 = vpack.c.b16 %v2325, %v2324
        %v2341 = vpack.c.b16 %v2327, %v2326
        %v2342 = vpack.c.b16 %v2329, %v2328
        %v2343 = vpack.c.b16 %v2331, %v2330
        %v2344 = vpack.c.b16 %v2333, %v2332
        %v2345 = vpack.c.b16 %v2335, %v2334
        %v2346 = vpack.c.b16 %v2337, %v2336
        %v2347 = vpack.c.b16 %v2339, %v2338
        %2356 = vmatprep.subr.bf16.mxu0 0
        %2357 = vmatpush1.bf16.msra.mxu0 %v2340
        %2358 = vmatprep.subr.bf16.mxu0 0
        %2359 = vmatpush1.bf16.msra.mxu0 %v2341
        %2360 = vmatprep.subr.bf16.mxu0 0
        %2361 = vmatpush1.bf16.msra.mxu0 %v2342
        %2362 = vmatprep.subr.bf16.mxu0 0
        %2363 = vmatpush1.bf16.msra.mxu0 %v2343
        %2364 = vmatprep.subr.bf16.mxu0 0
        %2365 = vmatpush1.bf16.msra.mxu0 %v2344
        %2366 = vmatprep.subr.bf16.mxu0 0
        %2367 = vmatpush1.bf16.msra.mxu0 %v2345
        %2368 = vmatprep.subr.bf16.mxu0 0
        %2369 = vmatpush1.bf16.msra.mxu0 %v2346
        %2370 = vmatprep.subr.bf16.mxu0 0
        %2371 = vmatpush1.bf16.msra.mxu0 %v2347
        %2372 = vmatprep.subr.bf16.mxu0 0
        %2373 = vmatpush1.bf16.msra.mxu0 0
        %2374 = vmatprep.subr.bf16.mxu0 0
        %2375 = vmatpush1.bf16.msra.mxu0 0
        %2376 = vmatprep.subr.bf16.mxu0 0
        %2377 = vmatpush1.bf16.msra.mxu0 0
        %2378 = vmatprep.subr.bf16.mxu0 0
        %2379 = vmatpush1.bf16.msra.mxu0 0
        %2380 = vmatprep.subr.bf16.mxu0 0
        %2381 = vmatpush1.bf16.msra.mxu0 0
        %2382 = vmatprep.subr.bf16.mxu0 0
        %2383 = vmatpush1.bf16.msra.mxu0 0
        %2384 = vmatprep.subr.bf16.mxu0 0
        %2385 = vmatpush1.bf16.msra.mxu0 0
        %2386 = vmatprep.subr.bf16.mxu0 0
        %2387 = vmatpush1.bf16.msra.mxu0 0
        %2388 = vmatprep.mubr.bf16.mxu0 0
        %2389 = vmatmul.mubr.bf16.gmra.mrb[0].mxu0 %v2276
        %v2390 = vpop.f32.mrb[0].mxu0
        %v2391 = vadd.f32 0.0, %v2390
        %v2392 = vpop.f32.mrb[0].mxu0
        %v2393 = vpop.f32.mrb[0].mxu0
        %v2394 = vadd.f32 0.0, %v2393
        %v2395 = vpop.f32.mrb[0].mxu0
        %2396 = vmatprep.mubr.bf16.mxu0 0
        %2397 = vmatmul.mubr.bf16.gmra.mrb[0].mxu0 %v2277
        %v2398 = vpop.f32.mrb[0].mxu0
        %v2399 = vadd.f32 0.0, %v2398
        %v2400 = vpop.f32.mrb[0].mxu0
        %v2401 = vpop.f32.mrb[0].mxu0
        %v2402 = vadd.f32 0.0, %v2401
        %v2403 = vpop.f32.mrb[0].mxu0
        %2404 = vmatprep.mubr.bf16.mxu0 0
        %2405 = vmatmul.mubr.bf16.gmra.mrb[0].mxu0 %v2278
        %v2406 = vpop.f32.mrb[0].mxu0
        %v2407 = vadd.f32 0.0, %v2406
        %v2408 = vpop.f32.mrb[0].mxu0
        %v2409 = vpop.f32.mrb[0].mxu0
        %v2410 = vadd.f32 0.0, %v2409
        %v2411 = vpop.f32.mrb[0].mxu0
        %2412 = vmatprep.mubr.bf16.mxu0 0
        %2413 = vmatmul.mubr.bf16.gmra.mrb[0].mxu0 %v2279
        %v2414 = vpop.f32.mrb[0].mxu0
        %v2415 = vadd.f32 0.0, %v2414
        %v2416 = vpop.f32.mrb[0].mxu0
        %v2417 = vpop.f32.mrb[0].mxu0
        %v2418 = vadd.f32 0.0, %v2417
        %v2419 = vpop.f32.mrb[0].mxu0
        %2420 = vmatprep.mubr.bf16.mxu0 0
        %2421 = vmatmul.mubr.bf16.gmra.mrb[0].mxu0 %v2280
        %v2422 = vpop.f32.mrb[0].mxu0
        %v2423 = vadd.f32 0.0, %v2422
        %v2424 = vpop.f32.mrb[0].mxu0
        %v2425 = vpop.f32.mrb[0].mxu0
        %v2426 = vadd.f32 0.0, %v2425
        %v2427 = vpop.f32.mrb[0].mxu0
        %2428 = vmatprep.mubr.bf16.mxu0 0
        %2429 = vmatmul.mubr.bf16.gmra.mrb[0].mxu0 %v2281
        %v2430 = vpop.f32.mrb[0].mxu0
        %v2431 = vadd.f32 0.0, %v2430
        %v2432 = vpop.f32.mrb[0].mxu0
        %v2433 = vpop.f32.mrb[0].mxu0
        %v2434 = vadd.f32 0.0, %v2433
        %v2435 = vpop.f32.mrb[0].mxu0
        %2436 = vmatprep.mubr.bf16.mxu0 0
        %2437 = vmatmul.mubr.bf16.gmra.mrb[0].mxu0 %v2282
        %v2438 = vpop.f32.mrb[0].mxu0
        %v2439 = vadd.f32 0.0, %v2438
        %v2440 = vpop.f32.mrb[0].mxu0
        %v2441 = vpop.f32.mrb[0].mxu0
        %v2442 = vadd.f32 0.0, %v2441
        %v2443 = vpop.f32.mrb[0].mxu0
        %2444 = vmatprep.mubr.bf16.mxu0 0
        %2445 = vmatmul.mubr.bf16.gmra.mrb[0].mxu0 %v2283
        %v2446 = vpop.f32.mrb[0].mxu0
        %v2447 = vadd.f32 0.0, %v2446
        %v2448 = vpop.f32.mrb[0].mxu0
        %v2449 = vpop.f32.mrb[0].mxu0
        %v2450 = vadd.f32 0.0, %v2449
        %v2451 = vpop.f32.mrb[0].mxu0
        %2452 = vmatprep.mubr.bf16.mxu0 0
        %2453 = vmatmul.mubr.bf16.gmra.mrb[0].mxu0 %v2284
        %v2454 = vpop.f32.mrb[0].mxu0
        %v2455 = vadd.f32 0.0, %v2454
        %v2456 = vpop.f32.mrb[0].mxu0
        %v2457 = vpop.f32.mrb[0].mxu0
        %v2458 = vadd.f32 0.0, %v2457
        %v2459 = vpop.f32.mrb[0].mxu0
        %2460 = vmatprep.mubr.bf16.mxu0 0
        %2461 = vmatmul.mubr.bf16.gmra.mrb[0].mxu0 %v2285
        %v2462 = vpop.f32.mrb[0].mxu0
        %v2463 = vadd.f32 0.0, %v2462
        %v2464 = vpop.f32.mrb[0].mxu0
        %v2465 = vpop.f32.mrb[0].mxu0
        %v2466 = vadd.f32 0.0, %v2465
        %v2467 = vpop.f32.mrb[0].mxu0
        %2468 = vmatprep.mubr.bf16.mxu0 0
        %2469 = vmatmul.mubr.bf16.gmra.mrb[0].mxu0 %v2286
        %v2470 = vpop.f32.mrb[0].mxu0
        %v2471 = vadd.f32 0.0, %v2470
        %v2472 = vpop.f32.mrb[0].mxu0
        %v2473 = vpop.f32.mrb[0].mxu0
        %v2474 = vadd.f32 0.0, %v2473
        %v2475 = vpop.f32.mrb[0].mxu0
        %2476 = vmatprep.mubr.bf16.mxu0 0
        %2477 = vmatmul.mubr.bf16.gmra.mrb[0].mxu0 %v2287
        %v2478 = vpop.f32.mrb[0].mxu0
        %v2479 = vadd.f32 0.0, %v2478
        %v2480 = vpop.f32.mrb[0].mxu0
        %v2481 = vpop.f32.mrb[0].mxu0
        %v2482 = vadd.f32 0.0, %v2481
        %v2483 = vpop.f32.mrb[0].mxu0
        %2484 = vmatprep.mubr.bf16.mxu0 0
        %2485 = vmatmul.mubr.bf16.gmra.mrb[0].mxu0 %v2288
        %v2486 = vpop.f32.mrb[0].mxu0
        %v2487 = vadd.f32 0.0, %v2486
        %v2488 = vpop.f32.mrb[0].mxu0
        %v2489 = vpop.f32.mrb[0].mxu0
        %v2490 = vadd.f32 0.0, %v2489
        %v2491 = vpop.f32.mrb[0].mxu0
        %2492 = vmatprep.mubr.bf16.mxu0 0
        %2493 = vmatmul.mubr.bf16.gmra.mrb[0].mxu0 %v2289
        %v2494 = vpop.f32.mrb[0].mxu0
        %v2495 = vadd.f32 0.0, %v2494
        %v2496 = vpop.f32.mrb[0].mxu0
        %v2497 = vpop.f32.mrb[0].mxu0
        %v2498 = vadd.f32 0.0, %v2497
        %v2499 = vpop.f32.mrb[0].mxu0
        %2500 = vmatprep.mubr.bf16.mxu0 0
        %2501 = vmatmul.mubr.bf16.gmra.mrb[0].mxu0 %v2290
        %v2502 = vpop.f32.mrb[0].mxu0
        %v2503 = vadd.f32 0.0, %v2502
        %v2504 = vpop.f32.mrb[0].mxu0
        %v2505 = vpop.f32.mrb[0].mxu0
        %v2506 = vadd.f32 0.0, %v2505
        %v2507 = vpop.f32.mrb[0].mxu0
        %2508 = vmatprep.mubr.bf16.mxu0 0
        %2509 = vmatmul.mubr.bf16.gmra.mrb[0].mxu0 %v2291
        %v2510 = vpop.f32.mrb[0].mxu0
        %v2511 = vadd.f32 0.0, %v2510
        %v2512 = vpop.f32.mrb[0].mxu0
        %v2513 = vpop.f32.mrb[0].mxu0
        %v2514 = vadd.f32 0.0, %v2513
        %v2515 = vpop.f32.mrb[0].mxu0
        %2516 = vdwg.mxu0
        %v2517 = vpack.c.bf16 %v2394, %v2391
        %v2518 = vpack.c.bf16 %v2402, %v2399
        %v2519 = vpack.c.bf16 %v2410, %v2407
        %v2520 = vpack.c.bf16 %v2418, %v2415
        %v2521 = vpack.c.bf16 %v2426, %v2423
        %v2522 = vpack.c.bf16 %v2434, %v2431
        %v2523 = vpack.c.bf16 %v2442, %v2439
        %v2524 = vpack.c.bf16 %v2450, %v2447
        %v2525 = vpack.c.bf16 %v2458, %v2455
        %v2526 = vpack.c.bf16 %v2466, %v2463
        %v2527 = vpack.c.bf16 %v2474, %v2471
        %v2528 = vpack.c.bf16 %v2482, %v2479
        %v2529 = vpack.c.bf16 %v2490, %v2487
        %v2530 = vpack.c.bf16 %v2498, %v2495
        %v2531 = vpack.c.bf16 %v2506, %v2503
        %v2532 = vpack.c.bf16 %v2514, %v2511
        %v2549 = vunpack.c.l.b16 %v2517
        %v2550 = vunpack.c.h.b16 %v2517
        %v2551 = vunpack.c.l.b16 %v2518
        %v2552 = vunpack.c.h.b16 %v2518
        %v2553 = vunpack.c.l.b16 %v2519
        %v2554 = vunpack.c.h.b16 %v2519
        %v2555 = vunpack.c.l.b16 %v2520
        %v2556 = vunpack.c.h.b16 %v2520
        %v2557 = vunpack.c.l.b16 %v2521
        %v2558 = vunpack.c.h.b16 %v2521
        %v2559 = vunpack.c.l.b16 %v2522
        %v2560 = vunpack.c.h.b16 %v2522
        %v2561 = vunpack.c.l.b16 %v2523
        %v2562 = vunpack.c.h.b16 %v2523
        %v2563 = vunpack.c.l.b16 %v2524
        %v2564 = vunpack.c.h.b16 %v2524
        %v2565 = vunpack.c.l.b16 %v2525
        %v2566 = vunpack.c.h.b16 %v2525
        %v2567 = vunpack.c.l.b16 %v2526
        %v2568 = vunpack.c.h.b16 %v2526
        %v2569 = vunpack.c.l.b16 %v2527
        %v2570 = vunpack.c.h.b16 %v2527
        %v2571 = vunpack.c.l.b16 %v2528
        %v2572 = vunpack.c.h.b16 %v2528
        %v2573 = vunpack.c.l.b16 %v2529
        %v2574 = vunpack.c.h.b16 %v2529
        %v2575 = vunpack.c.l.b16 %v2530
        %v2576 = vunpack.c.h.b16 %v2530
        %v2577 = vunpack.c.l.b16 %v2531
        %v2578 = vunpack.c.h.b16 %v2531
        %v2579 = vunpack.c.l.b16 %v2532
        %v2580 = vunpack.c.h.b16 %v2532
        %v2581 = vpack.c.b16 %v2549, %v2549
        %v2582 = vpack.c.b16 %v2550, %v2550
        %v2583 = vpack.c.b16 %v2551, %v2551
        %v2584 = vpack.c.b16 %v2552, %v2552
        %v2585 = vpack.c.b16 %v2553, %v2553
        %v2586 = vpack.c.b16 %v2554, %v2554
        %v2587 = vpack.c.b16 %v2555, %v2555
        %v2588 = vpack.c.b16 %v2556, %v2556
        %v2589 = vpack.c.b16 %v2557, %v2557
        %v2590 = vpack.c.b16 %v2558, %v2558
        %v2591 = vpack.c.b16 %v2559, %v2559
        %v2592 = vpack.c.b16 %v2560, %v2560
        %v2593 = vpack.c.b16 %v2561, %v2561
        %v2594 = vpack.c.b16 %v2562, %v2562
        %v2595 = vpack.c.b16 %v2563, %v2563
        %v2596 = vpack.c.b16 %v2564, %v2564
        %v2597 = vpack.c.b16 %v2565, %v2565
        %v2598 = vpack.c.b16 %v2566, %v2566
        %v2599 = vpack.c.b16 %v2567, %v2567
        %v2600 = vpack.c.b16 %v2568, %v2568
        %v2601 = vpack.c.b16 %v2569, %v2569
        %v2602 = vpack.c.b16 %v2570, %v2570
        %v2603 = vpack.c.b16 %v2571, %v2571
        %v2604 = vpack.c.b16 %v2572, %v2572
        %v2605 = vpack.c.b16 %v2573, %v2573
        %v2606 = vpack.c.b16 %v2574, %v2574
        %v2607 = vpack.c.b16 %v2575, %v2575
        %v2608 = vpack.c.b16 %v2576, %v2576
        %v2609 = vpack.c.b16 %v2577, %v2577
        %v2610 = vpack.c.b16 %v2578, %v2578
        %v2611 = vpack.c.b16 %v2579, %v2579
        %v2612 = vpack.c.b16 %v2580, %v2580
        %2645 = vst [vmem:[%s265] sm:$0xf] %v2581
        %2646 = vst [vmem:[%s265 + $0x4] sm:$0xf] %v2582
        %2647 = vst [vmem:[%s265 + $0x8] sm:$0xf] %v2583
        %2648 = vst [vmem:[%s265 + $0xc] sm:$0xf] %v2584
        %2649 = vst [vmem:[%s265 + $0x10] sm:$0xf] %v2585
        %2650 = vst [vmem:[%s265 + $0x14] sm:$0xf] %v2586
        %2651 = vst [vmem:[%s265 + $0x18] sm:$0xf] %v2587
        %2652 = vst [vmem:[%s265 + $0x1c] sm:$0xf] %v2588
        %2653 = vst [vmem:[%s265 + $0x20] sm:$0xf] %v2589
        %2654 = vst [vmem:[%s265 + $0x24] sm:$0xf] %v2590
        %2655 = vst [vmem:[%s265 + $0x28] sm:$0xf] %v2591
        %2656 = vst [vmem:[%s265 + $0x2c] sm:$0xf] %v2592
        %2657 = vst [vmem:[%s265 + $0x30] sm:$0xf] %v2593
        %2658 = vst [vmem:[%s265 + $0x34] sm:$0xf] %v2594
        %2659 = vst [vmem:[%s265 + $0x38] sm:$0xf] %v2595
        %2660 = vst [vmem:[%s265 + $0x3c] sm:$0xf] %v2596
        %2661 = vst [vmem:[%s265 + $0x40] sm:$0xf] %v2597
        %2662 = vst [vmem:[%s265 + $0x44] sm:$0xf] %v2598
        %2663 = vst [vmem:[%s265 + $0x48] sm:$0xf] %v2599
        %2664 = vst [vmem:[%s265 + $0x4c] sm:$0xf] %v2600
        %2665 = vst [vmem:[%s265 + $0x50] sm:$0xf] %v2601
        %2666 = vst [vmem:[%s265 + $0x54] sm:$0xf] %v2602
        %2667 = vst [vmem:[%s265 + $0x58] sm:$0xf] %v2603
        %2668 = vst [vmem:[%s265 + $0x5c] sm:$0xf] %v2604
        %2669 = vst [vmem:[%s265 + $0x60] sm:$0xf] %v2605
        %2670 = vst [vmem:[%s265 + $0x64] sm:$0xf] %v2606
        %2671 = vst [vmem:[%s265 + $0x68] sm:$0xf] %v2607
        %2672 = vst [vmem:[%s265 + $0x6c] sm:$0xf] %v2608
        %2673 = vst [vmem:[%s265 + $0x70] sm:$0xf] %v2609
        %2674 = vst [vmem:[%s265 + $0x74] sm:$0xf] %v2610
        %2675 = vst [vmem:[%s265 + $0x78] sm:$0xf] %v2611
        %2676 = vst [vmem:[%s265 + $0x7c] sm:$0xf] %v2612
        %s2677 = sand.u32 %s138, 1
        %s2678 = scalar_lea.sflag [#allocation4], %s2677
        %s2679 = sand.u32 %s138, 1
        %s2680 = smul.addr %s2679, 128
        %s2681 = scalar_lea.vmem [#allocation8], %s2680
        // Predicated region
        $region49: #{tpu_custom_call.1} parent=35 // pred_check
          %p2682 = pneg %p148
        $region50: #{tpu_custom_call.1} parent=35 // pred_check_branch
          %2684 = sbr.rel (%p2682) target = $region52
        $region51: #{tpu_custom_call.1} parent=35 // pred_region
          %s2685 = smul.u32 32, %s26
          %s2687 = ssub.s32 2048, 2048
          %2688 = vsyncadd %s2678, %s2687
          %s2689 = sadd.s32 %s27, %s2685
          %s2690 = smul.addr %s2689, 64
          %s2691 = scalar_lea.hbm %s4, %s2690
          %s2692 = sshll.u32 %s2681, 4
          %s2693 = int_to_ptr.vmem [resolvable:$true] %s2692
          %2698 = dma.vmem_to_hbm [thread:$0]  %s2693, 2048, %s2691, %s2678, 64, 64, 4
        $region52: #{tpu_custom_call.1} parent=35 // pred_fallthru
          _
      $region36: #{tpu_custom_call.1} parent=5 // pred_fallthru
        _
      %p2699 = scmp.le.s32.totalorder 2, %s17
      // Predicated region
      $region53: #{tpu_custom_call.1} parent=5 // pred_check
        %p2700 = pneg %p2699
      $region54: #{tpu_custom_call.1} parent=5 // pred_check_branch
        %2702 = sbr.rel (%p2700) target = $region56
      $region55: #{tpu_custom_call.1} parent=5 // pred_region
        %s2703 = ssub.s32 %s17, 2
        // Predicated region
        $region57: #{tpu_custom_call.1} parent=55 // pred_check
          %p2704 = pneg %p154
        $region58: #{tpu_custom_call.1} parent=55 // pred_check_branch
          %2706 = sbr.rel (%p2704) target = $region60
        $region59: #{tpu_custom_call.1} parent=55 // pred_region
          %s2707 = sand.u32 %s139, 1
          %s2708 = scalar_lea.sflag [#allocation4], %s2707
          %s2709 = sand.u32 %s139, 1
          %s2710 = smul.addr %s2709, 128
          %s2711 = scalar_lea.vmem [#allocation8], %s2710
          %2712 = dma.done %s2708, 2048
        $region60: #{tpu_custom_call.1} parent=55 // pred_fallthru
          _
      $region56: #{tpu_custom_call.1} parent=5 // pred_fallthru
        _
    $region6: #{tpu_custom_call.1} parent=1 // loop_footer
      %s21 = sadd.s32 1, %s17
    $region7: #{tpu_custom_call.1} parent=1 // loop_footer_branch
      %16 = sbr.rel target = $region3
    $region8: #{tpu_custom_call.1} parent=1 // loop_exit
      _
    %2713 = vsyncpa [#allocation3], 1
    %s2714 = scalar_lea.sflag [#allocation3], 1
    %2715 = vsyncpa %s2714, 1
    %2716 = vsyncpa [#allocation6], 1
    %2717 = vsyncpa [#allocation4], 1
    %s2718 = scalar_lea.sflag [#allocation4], 1
    %2719 = vsyncpa %s2718, 1

</llo_original>
